<compile_context>
chip_gen: v5e
topology: v5e:2x2
jax: 0.10.0
libtpu: 0.0.40
codegen_flags: <defaults>
</compile_context>

<pallas_src>
import functools

import jax
import jax.numpy as jnp
from jax.experimental import pallas as pl
from jax.experimental.pallas import tpu as pltpu

EPS = 1e-5  # PyTorch BatchNorm2d default eps


def _conv_stats_kernel(x_ref, scale_ref, shift_ref, w9_ref, mask_ref,
                       out_ref, stats_ref, xe_ref, x9_ref, *, Wp, apply_relu):
    """One image: y = [relu](x*scale+shift)*mask ; out = conv3x3(y) ; BN partials.

    x_ref:     (Cin, S)      flat padded-geometry image (S = Hp*Wp)
    scale/shift: (Cin, 1)    folded-BN affine applied to the *input* (identity for conv1)
    w9_ref:    (Cout, 9*Cin) fused tap weights, taps (dy, dx) row-major, bf16
    mask_ref:  (1, S)        1.0 at interior pixels, 0.0 at halo pixels
    out_ref:   (Cout, S)     raw (pre-BN) conv output, f32
    stats_ref: (Cout, 2)     [:, 0] = sum over interior, [:, 1] = sum of squares
    xe_ref:    (Cin, S+2*(Wp+1)) bf16 staging (zero-extended flat image)
    x9_ref:    (9*Cin, S)    bf16 staging (fused im2col operand)
    """
    cin, s_len = x_ref.shape
    halo = Wp + 1
    mask = mask_ref[...]

    # Input affine (folded BN of the previous conv) + optional ReLU, then
    # re-zero the halo pixels so the conv reads exact zero padding.
    x = x_ref[...].astype(jnp.float32) * scale_ref[...] + shift_ref[...]
    if apply_relu:
        x = jnp.maximum(x, 0.0)
    x = x * mask

    # Zero-extended staging buffer: every tap becomes a static lane-slice.
    xe_ref[...] = jnp.zeros_like(xe_ref)
    xe_ref[:, halo:halo + s_len] = x.astype(jnp.bfloat16)

    # Build the fused (9*Cin, S) operand: tap (dy, dx) sources offset
    # (dy-1)*Wp + (dx-1) in flat padded coordinates.
    for dy in range(3):
        for dx in range(3):
            t = dy * 3 + dx
            off = (dy - 1) * Wp + (dx - 1)
            x9_ref[t * cin:(t + 1) * cin, :] = \
                xe_ref[:, halo + off: halo + off + s_len]

    # Single MXU matmul per conv: bf16 inputs, f32 accumulation.
    acc = jnp.dot(w9_ref[...].astype(jnp.bfloat16), x9_ref[...],
                  preferred_element_type=jnp.float32)          # (Cout, S)
    out_ref[...] = acc.astype(out_ref.dtype)

    # Single-pass BatchNorm partial statistics over interior pixels only.
    am = acc * mask
    stats_ref[:, 0:1] = jnp.sum(am, axis=1, keepdims=True)       # sum
    stats_ref[:, 1:2] = jnp.sum(am * acc, axis=1, keepdims=True)  # sum of squares


def _residual_kernel(x_ref, a2_ref, scale_ref, shift_ref, out_ref):
    """out = relu(x + (a2*scale + shift)) on one flat image (halo lanes are junk)."""
    z = a2_ref[...].astype(jnp.float32) * scale_ref[...] + shift_ref[...]
    out_ref[...] = jnp.maximum(x_ref[...].astype(jnp.float32) + z, 0.0)


def _full_spec(shape):
    ndim = len(shape)
    return pl.BlockSpec(shape, lambda *_: (0,) * ndim)  # fetched once, never re-DMA'd


def _conv_call(n, cin, cout, s_len, Wp, *, apply_relu):
    halo = Wp + 1
    kern = functools.partial(_conv_stats_kernel, Wp=Wp, apply_relu=apply_relu)
    flops = 2 * n * s_len * cout * 9 * cin
    bytes_accessed = (n * cin * s_len * 4 + n * cout * s_len * 4
                      + cout * 9 * cin * 2 + n * cout * 2 * 4 + s_len * 4)
    return pl.pallas_call(
        kern,
        grid=(n,),
        in_specs=[
            pl.BlockSpec((None, cin, s_len), lambda i: (i, 0, 0)),   # x (per image)
            _full_spec((cin, 1)),                                    # scale
            _full_spec((cin, 1)),                                    # shift
            _full_spec((cout, 9 * cin)),                             # fused weights
            _full_spec((1, s_len)),                                  # interior mask
        ],
        out_specs=[
            pl.BlockSpec((None, cout, s_len), lambda i: (i, 0, 0)),  # raw conv out
            pl.BlockSpec((None, cout, 2), lambda i: (i, 0, 0)),      # BN partials
        ],
        out_shape=[
            jax.ShapeDtypeStruct((n, cout, s_len), jnp.float32),
            jax.ShapeDtypeStruct((n, cout, 2), jnp.float32),
        ],
        scratch_shapes=[
            pltpu.VMEM((cin, s_len + 2 * halo), jnp.bfloat16),       # xe staging
            pltpu.VMEM((9 * cin, s_len), jnp.bfloat16),              # x9 staging
        ],
        compiler_params=pltpu.CompilerParams(
            dimension_semantics=("parallel",)),
        cost_estimate=pl.CostEstimate(flops=flops, transcendentals=0,
                                      bytes_accessed=bytes_accessed),
    )


def _residual_call(n, c, s_len):
    return pl.pallas_call(
        _residual_kernel,
        grid=(n,),
        in_specs=[
            pl.BlockSpec((None, c, s_len), lambda i: (i, 0, 0)),     # x
            pl.BlockSpec((None, c, s_len), lambda i: (i, 0, 0)),     # a2
            _full_spec((c, 1)),                                      # scale2
            _full_spec((c, 1)),                                      # shift2
        ],
        out_specs=pl.BlockSpec((None, c, s_len), lambda i: (i, 0, 0)),
        out_shape=jax.ShapeDtypeStruct((n, c, s_len), jnp.float32),
        compiler_params=pltpu.CompilerParams(
            dimension_semantics=("parallel",)),
    )


def _finalize_bn(stats, gamma, beta, count):
    """Reduce per-image (sum, sumsq) partials -> per-channel (scale, shift) affine."""
    s = jnp.sum(stats, axis=0)                       # (C, 2)
    mean = s[:, 0] / count
    var = s[:, 1] / count - mean * mean              # biased var (PyTorch training mode)
    scale = gamma * jax.lax.rsqrt(var + EPS)
    shift = beta - mean * scale
    return scale.reshape(-1, 1), shift.reshape(-1, 1)


@jax.jit
def resblock_forward(x_nchw, w1, w2, g1, b1, g2, b2):
    """x: (N,C,H,W) f32. w1/w2: (Cout,Cin,3,3) OIHW (PyTorch). g/b: (Cout,)."""
    n, c, h, w = x_nchw.shape
    cout = w1.shape[0]
    assert cout == c, "subsample=False residual requires c_in == c_out"
    hp, wp = h + 2, w + 2
    s_len = hp * wp

    # Layout prep (one fused XLA copy): spatial zero halo + per-image flat (N, C, S).
    xflat = jnp.pad(x_nchw, ((0, 0), (0, 0), (1, 1), (1, 1))).reshape(n, c, s_len)

    # Fused tap weights: (Cout, Cin, 3, 3) -> (Cout, (dy, dx, Cin)) = (Cout, 9*Cin), bf16.
    w9_1 = jnp.transpose(w1, (0, 2, 3, 1)).reshape(cout, 9 * c).astype(jnp.bfloat16)
    w9_2 = jnp.transpose(w2, (0, 2, 3, 1)).reshape(cout, 9 * cout).astype(jnp.bfloat16)

    # Interior-pixel mask over the flat padded geometry.
    yy, xx = jnp.meshgrid(jnp.arange(hp), jnp.arange(wp), indexing="ij")
    interior = (yy >= 1) & (yy <= h) & (xx >= 1) & (xx <= w)
    mask = interior.reshape(1, s_len).astype(jnp.float32)

    ident = jnp.ones((c, 1), jnp.float32)
    zero = jnp.zeros((c, 1), jnp.float32)
    count = float(n * h * w)

    # conv1 (+ per-image BN1 partial sums)
    a1, st1 = _conv_call(n, c, cout, s_len, wp, apply_relu=False)(
        xflat, ident, zero, w9_1, mask)
    scale1, shift1 = _finalize_bn(st1, g1, b1, count)

    # BN1 + ReLU folded into conv2's input affine; conv2 (+ BN2 partial sums)
    a2, st2 = _conv_call(n, cout, cout, s_len, wp, apply_relu=True)(
        a1, scale1, shift1, w9_2, mask)
    scale2, shift2 = _finalize_bn(st2, g2, b2, count)

    # BN2 + residual + ReLU
    out_flat = _residual_call(n, c, s_len)(xflat, a2, scale2, shift2)
    return out_flat.reshape(n, c, hp, wp)[:, :, 1:h + 1, 1:w + 1]


def resblock_ref(x, w1, w2, g1, b1, g2, b2):
    """Pure-JAX (XLA conv) f32 reference for correctness checking."""
    dn = ('NCHW', 'OIHW', 'NCHW')

    def bn(a, g, b):
        m = jnp.mean(a, axis=(0, 2, 3), keepdims=True)
        v = jnp.mean((a - m) ** 2, axis=(0, 2, 3), keepdims=True)
        return ((a - m) * jax.lax.rsqrt(v + EPS) * g.reshape(1, -1, 1, 1)
                + b.reshape(1, -1, 1, 1))

    a1 = jax.lax.conv_general_dilated(x, w1, (1, 1), 'SAME', dimension_numbers=dn)
    y = jax.nn.relu(bn(a1, g1, b1))
    a2 = jax.lax.conv_general_dilated(y, w2, (1, 1), 'SAME', dimension_numbers=dn)
    z = bn(a2, g2, b2)
    return jax.nn.relu(x + z)


if __name__ == "__main__":
    key = jax.random.PRNGKey(0)
    ks = jax.random.split(key, 7)
    N, C, H, W = 2, 4, 16, 16  # c_in == c_out (subsample=False)

    x = jax.random.normal(ks[0], (N, C, H, W), jnp.float32)
    # Conv weights in PyTorch OIHW layout.
    w1 = 0.1 * jax.random.normal(ks[1], (C, C, 3, 3), jnp.float32)
    w2 = 0.1 * jax.random.normal(ks[2], (C, C, 3, 3), jnp.float32)
    # BatchNorm affine params (deterministic, non-trivial).
    g1 = 1.0 + 0.1 * jax.random.normal(ks[3], (C,), jnp.float32)
    b1 = 0.1 * jax.random.normal(ks[4], (C,), jnp.float32)
    g2 = 1.0 + 0.1 * jax.random.normal(ks[5], (C,), jnp.float32)
    b2 = 0.1 * jax.random.normal(ks[6], (C,), jnp.float32)

    out = jax.block_until_ready(resblock_forward(x, w1, w2, g1, b1, g2, b2))
    ref = resblock_ref(x, w1, w2, g1, b1, g2, b2)

    assert out.shape == (N, C, H, W), out.shape
    # bf16 MXU operands (per perf guidance) set the error floor; accumulation
    # and BatchNorm math stay in f32, so errors remain small relative to O(1) outputs.
    err_max = float(jnp.max(jnp.abs(out - ref)))
    err_l2 = float(jnp.linalg.norm(out - ref) / (jnp.linalg.norm(ref) + 1e-12))
    assert err_l2 < 2.5e-2 and err_max < 1.0e-1, (err_l2, err_max)
    print("KERNEL_OK")
</pallas_src>

<mosaic_0001>
module attributes {stable_mosaic.version = 11 : i64} {
  func.func @_conv_stats_kernel(%arg0: i32, %arg1: memref<1x4x324xf32, #tpu.memory_space<vmem>>, %arg2: memref<4x1xf32, #tpu.memory_space<vmem>>, %arg3: memref<4x1xf32, #tpu.memory_space<vmem>>, %arg4: memref<4x36xbf16, #tpu.memory_space<vmem>>, %arg5: memref<1x324xf32, #tpu.memory_space<vmem>>, %arg6: memref<1x4x324xf32, #tpu.memory_space<vmem>>, %arg7: memref<1x4x2xf32, #tpu.memory_space<vmem>>, %arg8: memref<4x362xbf16, #tpu.memory_space<vmem>>, %arg9: memref<36x324xbf16, #tpu.memory_space<vmem>>) attributes {dimension_semantics = [#tpu.dimension_semantics<parallel>], iteration_bounds = array<i64: 2>, scalar_prefetch = 0 : i64, scratch_operands = 2 : i64, tpu.core_type = #tpu.core_type<tc>, window_params = [{transform_indices = @transform_0, window_bounds = array<i64: 1, 4, 324>}, {pipeline_mode = #tpu.pipeline_mode<synchronous>, transform_indices = @transform_1, window_bounds = array<i64: 4, 1>}, {pipeline_mode = #tpu.pipeline_mode<synchronous>, transform_indices = @transform_2, window_bounds = array<i64: 4, 1>}, {pipeline_mode = #tpu.pipeline_mode<synchronous>, transform_indices = @transform_3, window_bounds = array<i64: 4, 36>}, {pipeline_mode = #tpu.pipeline_mode<synchronous>, transform_indices = @transform_4, window_bounds = array<i64: 1, 324>}, {transform_indices = @transform_5, window_bounds = array<i64: 1, 4, 324>}, {transform_indices = @transform_6, window_bounds = array<i64: 1, 4, 2>}]} {
    %c0 = arith.constant 0 : index
    %c0_0 = arith.constant 0 : index
    %0 = vector.load %arg5[%c0, %c0_0] : memref<1x324xf32, #tpu.memory_space<vmem>>, vector<1x324xf32>
    %c0_1 = arith.constant 0 : index
    %c0_2 = arith.constant 0 : index
    %c0_3 = arith.constant 0 : index
    %1 = vector.load %arg1[%c0_1, %c0_2, %c0_3] : memref<1x4x324xf32, #tpu.memory_space<vmem>>, vector<1x4x324xf32>
    %2 = vector.shape_cast %1 : vector<1x4x324xf32> to vector<4x324xf32>
    %c0_4 = arith.constant 0 : index
    %c0_5 = arith.constant 0 : index
    %3 = vector.load %arg2[%c0_4, %c0_5] : memref<4x1xf32, #tpu.memory_space<vmem>>, vector<4x1xf32>
    %4 = vector.broadcast %3 : vector<4x1xf32> to vector<4x324xf32>
    %5 = arith.mulf %2, %4 : vector<4x324xf32>
    %c0_6 = arith.constant 0 : index
    %c0_7 = arith.constant 0 : index
    %6 = vector.load %arg3[%c0_6, %c0_7] : memref<4x1xf32, #tpu.memory_space<vmem>>, vector<4x1xf32>
    %7 = vector.broadcast %6 : vector<4x1xf32> to vector<4x324xf32>
    %8 = arith.addf %5, %7 : vector<4x324xf32>
    %9 = vector.broadcast %0 : vector<1x324xf32> to vector<4x324xf32>
    %10 = arith.mulf %8, %9 : vector<4x324xf32>
    %cst = arith.constant 0.000000e+00 : bf16
    %11 = vector.broadcast %cst : bf16 to vector<4x362xbf16>
    %c0_8 = arith.constant 0 : index
    %c0_9 = arith.constant 0 : index
    %12 = vector.load %arg8[%c0_8, %c0_9] : memref<4x362xbf16, #tpu.memory_space<vmem>>, vector<4x362xbf16>
    tpu.vector_store %arg8[%c0_8, %c0_9], %11 {strides = array<i32>} : memref<4x362xbf16, #tpu.memory_space<vmem>>, vector<4x362xbf16>,
    %13 = arith.truncf %10 : vector<4x324xf32> to vector<4x324xbf16>
    %c0_10 = arith.constant 0 : index
    %c19 = arith.constant 19 : index
    %14 = vector.load %arg8[%c0_10, %c19] : memref<4x362xbf16, #tpu.memory_space<vmem>>, vector<4x324xbf16>
    tpu.vector_store %arg8[%c0_10, %c19], %13 {strides = array<i32>} : memref<4x362xbf16, #tpu.memory_space<vmem>>, vector<4x324xbf16>,
    %c0_11 = arith.constant 0 : index
    %c0_12 = arith.constant 0 : index
    %15 = vector.load %arg8[%c0_11, %c0_12] : memref<4x362xbf16, #tpu.memory_space<vmem>>, vector<4x324xbf16>
    %c0_13 = arith.constant 0 : index
    %c0_14 = arith.constant 0 : index
    %16 = vector.load %arg9[%c0_13, %c0_14] : memref<36x324xbf16, #tpu.memory_space<vmem>>, vector<4x324xbf16>
    tpu.vector_store %arg9[%c0_13, %c0_14], %15 {strides = array<i32>} : memref<36x324xbf16, #tpu.memory_space<vmem>>, vector<4x324xbf16>,
    %c0_15 = arith.constant 0 : index
    %c1 = arith.constant 1 : index
    %17 = vector.load %arg8[%c0_15, %c1] : memref<4x362xbf16, #tpu.memory_space<vmem>>, vector<4x324xbf16>
    %c4 = arith.constant 4 : index
    %c0_16 = arith.constant 0 : index
    %18 = vector.load %arg9[%c4, %c0_16] : memref<36x324xbf16, #tpu.memory_space<vmem>>, vector<4x324xbf16>
    tpu.vector_store %arg9[%c4, %c0_16], %17 {strides = array<i32>} : memref<36x324xbf16, #tpu.memory_space<vmem>>, vector<4x324xbf16>,
    %c0_17 = arith.constant 0 : index
    %c2 = arith.constant 2 : index
    %19 = vector.load %arg8[%c0_17, %c2] : memref<4x362xbf16, #tpu.memory_space<vmem>>, vector<4x324xbf16>
    %c8 = arith.constant 8 : index
    %c0_18 = arith.constant 0 : index
    %20 = vector.load %arg9[%c8, %c0_18] : memref<36x324xbf16, #tpu.memory_space<vmem>>, vector<4x324xbf16>
    tpu.vector_store %arg9[%c8, %c0_18], %19 {strides = array<i32>} : memref<36x324xbf16, #tpu.memory_space<vmem>>, vector<4x324xbf16>,
    %c0_19 = arith.constant 0 : index
    %c18 = arith.constant 18 : index
    %21 = vector.load %arg8[%c0_19, %c18] : memref<4x362xbf16, #tpu.memory_space<vmem>>, vector<4x324xbf16>
    %c12 = arith.constant 12 : index
    %c0_20 = arith.constant 0 : index
    %22 = vector.load %arg9[%c12, %c0_20] : memref<36x324xbf16, #tpu.memory_space<vmem>>, vector<4x324xbf16>
    tpu.vector_store %arg9[%c12, %c0_20], %21 {strides = array<i32>} : memref<36x324xbf16, #tpu.memory_space<vmem>>, vector<4x324xbf16>,
    %c0_21 = arith.constant 0 : index
    %c19_22 = arith.constant 19 : index
    %23 = vector.load %arg8[%c0_21, %c19_22] : memref<4x362xbf16, #tpu.memory_space<vmem>>, vector<4x324xbf16>
    %c16 = arith.constant 16 : index
    %c0_23 = arith.constant 0 : index
    %24 = vector.load %arg9[%c16, %c0_23] : memref<36x324xbf16, #tpu.memory_space<vmem>>, vector<4x324xbf16>
    tpu.vector_store %arg9[%c16, %c0_23], %23 {strides = array<i32>} : memref<36x324xbf16, #tpu.memory_space<vmem>>, vector<4x324xbf16>,
    %c0_24 = arith.constant 0 : index
    %c20 = arith.constant 20 : index
    %25 = vector.load %arg8[%c0_24, %c20] : memref<4x362xbf16, #tpu.memory_space<vmem>>, vector<4x324xbf16>
    %c20_25 = arith.constant 20 : index
    %c0_26 = arith.constant 0 : index
    %26 = vector.load %arg9[%c20_25, %c0_26] : memref<36x324xbf16, #tpu.memory_space<vmem>>, vector<4x324xbf16>
    tpu.vector_store %arg9[%c20_25, %c0_26], %25 {strides = array<i32>} : memref<36x324xbf16, #tpu.memory_space<vmem>>, vector<4x324xbf16>,
    %c0_27 = arith.constant 0 : index
    %c36 = arith.constant 36 : index
    %27 = vector.load %arg8[%c0_27, %c36] : memref<4x362xbf16, #tpu.memory_space<vmem>>, vector<4x324xbf16>
    %c24 = arith.constant 24 : index
    %c0_28 = arith.constant 0 : index
    %28 = vector.load %arg9[%c24, %c0_28] : memref<36x324xbf16, #tpu.memory_space<vmem>>, vector<4x324xbf16>
    tpu.vector_store %arg9[%c24, %c0_28], %27 {strides = array<i32>} : memref<36x324xbf16, #tpu.memory_space<vmem>>, vector<4x324xbf16>,
    %c0_29 = arith.constant 0 : index
    %c37 = arith.constant 37 : index
    %29 = vector.load %arg8[%c0_29, %c37] : memref<4x362xbf16, #tpu.memory_space<vmem>>, vector<4x324xbf16>
    %c28 = arith.constant 28 : index
    %c0_30 = arith.constant 0 : index
    %30 = vector.load %arg9[%c28, %c0_30] : memref<36x324xbf16, #tpu.memory_space<vmem>>, vector<4x324xbf16>
    tpu.vector_store %arg9[%c28, %c0_30], %29 {strides = array<i32>} : memref<36x324xbf16, #tpu.memory_space<vmem>>, vector<4x324xbf16>,
    %c0_31 = arith.constant 0 : index
    %c38 = arith.constant 38 : index
    %31 = vector.load %arg8[%c0_31, %c38] : memref<4x362xbf16, #tpu.memory_space<vmem>>, vector<4x324xbf16>
    %c32 = arith.constant 32 : index
    %c0_32 = arith.constant 0 : index
    %32 = vector.load %arg9[%c32, %c0_32] : memref<36x324xbf16, #tpu.memory_space<vmem>>, vector<4x324xbf16>
    tpu.vector_store %arg9[%c32, %c0_32], %31 {strides = array<i32>} : memref<36x324xbf16, #tpu.memory_space<vmem>>, vector<4x324xbf16>,
    %c0_33 = arith.constant 0 : index
    %c0_34 = arith.constant 0 : index
    %33 = vector.load %arg4[%c0_33, %c0_34] : memref<4x36xbf16, #tpu.memory_space<vmem>>, vector<4x36xbf16>
    %c0_35 = arith.constant 0 : index
    %c0_36 = arith.constant 0 : index
    %34 = vector.load %arg9[%c0_35, %c0_36] : memref<36x324xbf16, #tpu.memory_space<vmem>>, vector<36x324xbf16>
    %cst_37 = arith.constant dense<0.000000e+00> : vector<4x324xf32>
    %35 = tpu.matmul %33, %34, %cst_37 {dimension_numbers = #tpu.dot_dimension_numbers<[1], [0], [0], [1], [0, 0, 1, 1], [], []>} : vector<4x36xbf16>, vector<36x324xbf16>, vector<4x324xf32> -> vector<4x324xf32>
    %c0_38 = arith.constant 0 : index
    %c0_39 = arith.constant 0 : index
    %c0_40 = arith.constant 0 : index
    %36 = vector.load %arg6[%c0_38, %c0_39, %c0_40] : memref<1x4x324xf32, #tpu.memory_space<vmem>>, vector<1x4x324xf32>
    %37 = vector.shape_cast %36 : vector<1x4x324xf32> to vector<4x324xf32>
    %38 = vector.shape_cast %35 : vector<4x324xf32> to vector<1x4x324xf32>
    tpu.vector_store %arg6[%c0_38, %c0_39, %c0_40], %38 {strides = array<i32>} : memref<1x4x324xf32, #tpu.memory_space<vmem>>, vector<1x4x324xf32>,
    %39 = vector.broadcast %0 : vector<1x324xf32> to vector<4x324xf32>
    %40 = arith.mulf %35, %39 : vector<4x324xf32>
    %cst_41 = arith.constant dense<0.000000e+00> : vector<4xf32>
    %41 = vector.multi_reduction <add>, %40, %cst_41 [1] : vector<4x324xf32> to vector<4xf32>
    %42 = vector.shape_cast %41 : vector<4xf32> to vector<4x1xf32>
    %c0_42 = arith.constant 0 : index
    %c0_43 = arith.constant 0 : index
    %c0_44 = arith.constant 0 : index
    %43 = vector.load %arg7[%c0_42, %c0_43, %c0_44] : memref<1x4x2xf32, #tpu.memory_space<vmem>>, vector<1x4x1xf32>
    %44 = vector.shape_cast %43 : vector<1x4x1xf32> to vector<4x1xf32>
    %45 = vector.shape_cast %42 : vector<4x1xf32> to vector<1x4x1xf32>
    tpu.vector_store %arg7[%c0_42, %c0_43, %c0_44], %45 {strides = array<i32>} : memref<1x4x2xf32, #tpu.memory_space<vmem>>, vector<1x4x1xf32>,
    %46 = arith.mulf %40, %35 : vector<4x324xf32>
    %cst_45 = arith.constant dense<0.000000e+00> : vector<4xf32>
    %47 = vector.multi_reduction <add>, %46, %cst_45 [1] : vector<4x324xf32> to vector<4xf32>
    %48 = vector.shape_cast %47 : vector<4xf32> to vector<4x1xf32>
    %c0_46 = arith.constant 0 : index
    %c0_47 = arith.constant 0 : index
    %c1_48 = arith.constant 1 : index
    %49 = vector.load %arg7[%c0_46, %c0_47, %c1_48] : memref<1x4x2xf32, #tpu.memory_space<vmem>>, vector<1x4x1xf32>
    %50 = vector.shape_cast %49 : vector<1x4x1xf32> to vector<4x1xf32>
    %51 = vector.shape_cast %48 : vector<4x1xf32> to vector<1x4x1xf32>
    tpu.vector_store %arg7[%c0_46, %c0_47, %c1_48], %51 {strides = array<i32>} : memref<1x4x2xf32, #tpu.memory_space<vmem>>, vector<1x4x1xf32>,
    return
  }
  func.func @transform_0(%arg0: i32) -> (i32, i32, i32) {
    %c0_i32 = arith.constant 0 : i32
    %c0_i32_0 = arith.constant 0 : i32
    %c0_i32_1 = arith.constant 0 : i32
    return %arg0, %c0_i32, %c0_i32_0 : i32, i32, i32
  }
  func.func @transform_1(%arg0: i32) -> (i32, i32) {
    %c0_i32 = arith.constant 0 : i32
    %c0_i32_0 = arith.constant 0 : i32
    %c0_i32_1 = arith.constant 0 : i32
    return %c0_i32, %c0_i32_0 : i32, i32
  }
  func.func @transform_2(%arg0: i32) -> (i32, i32) {
    %c0_i32 = arith.constant 0 : i32
    %c0_i32_0 = arith.constant 0 : i32
    %c0_i32_1 = arith.constant 0 : i32
    return %c0_i32, %c0_i32_0 : i32, i32
  }
  func.func @transform_3(%arg0: i32) -> (i32, i32) {
    %c0_i32 = arith.constant 0 : i32
    %c0_i32_0 = arith.constant 0 : i32
    %c0_i32_1 = arith.constant 0 : i32
    return %c0_i32, %c0_i32_0 : i32, i32
  }
  func.func @transform_4(%arg0: i32) -> (i32, i32) {
    %c0_i32 = arith.constant 0 : i32
    %c0_i32_0 = arith.constant 0 : i32
    %c0_i32_1 = arith.constant 0 : i32
    return %c0_i32, %c0_i32_0 : i32, i32
  }
  func.func @transform_5(%arg0: i32) -> (i32, i32, i32) {
    %c0_i32 = arith.constant 0 : i32
    %c0_i32_0 = arith.constant 0 : i32
    %c0_i32_1 = arith.constant 0 : i32
    return %arg0, %c0_i32, %c0_i32_0 : i32, i32, i32
  }
  func.func @transform_6(%arg0: i32) -> (i32, i32, i32) {
    %c0_i32 = arith.constant 0 : i32
    %c0_i32_0 = arith.constant 0 : i32
    %c0_i32_1 = arith.constant 0 : i32
    return %arg0, %c0_i32, %c0_i32_0 : i32, i32, i32
  }
}

module attributes {stable_mosaic.version = 11 : i64} {
  func.func @_residual_kernel(%arg0: i32, %arg1: memref<1x4x324xf32, #tpu.memory_space<vmem>>, %arg2: memref<1x4x324xf32, #tpu.memory_space<vmem>>, %arg3: memref<4x1xf32, #tpu.memory_space<vmem>>, %arg4: memref<4x1xf32, #tpu.memory_space<vmem>>, %arg5: memref<1x4x324xf32, #tpu.memory_space<vmem>>) attributes {dimension_semantics = [#tpu.dimension_semantics<parallel>], iteration_bounds = array<i64: 2>, scalar_prefetch = 0 : i64, scratch_operands = 0 : i64, tpu.core_type = #tpu.core_type<tc>, window_params = [{transform_indices = @transform_0, window_bounds = array<i64: 1, 4, 324>}, {transform_indices = @transform_1, window_bounds = array<i64: 1, 4, 324>}, {pipeline_mode = #tpu.pipeline_mode<synchronous>, transform_indices = @transform_2, window_bounds = array<i64: 4, 1>}, {pipeline_mode = #tpu.pipeline_mode<synchronous>, transform_indices = @transform_3, window_bounds = array<i64: 4, 1>}, {transform_indices = @transform_4, window_bounds = array<i64: 1, 4, 324>}]} {
    %c0 = arith.constant 0 : index
    %c0_0 = arith.constant 0 : index
    %c0_1 = arith.constant 0 : index
    %0 = vector.load %arg2[%c0, %c0_0, %c0_1] : memref<1x4x324xf32, #tpu.memory_space<vmem>>, vector<1x4x324xf32>
    %1 = vector.shape_cast %0 : vector<1x4x324xf32> to vector<4x324xf32>
    %c0_2 = arith.constant 0 : index
    %c0_3 = arith.constant 0 : index
    %2 = vector.load %arg3[%c0_2, %c0_3] : memref<4x1xf32, #tpu.memory_space<vmem>>, vector<4x1xf32>
    %3 = vector.broadcast %2 : vector<4x1xf32> to vector<4x324xf32>
    %4 = arith.mulf %1, %3 : vector<4x324xf32>
    %c0_4 = arith.constant 0 : index
    %c0_5 = arith.constant 0 : index
    %5 = vector.load %arg4[%c0_4, %c0_5] : memref<4x1xf32, #tpu.memory_space<vmem>>, vector<4x1xf32>
    %6 = vector.broadcast %5 : vector<4x1xf32> to vector<4x324xf32>
    %7 = arith.addf %4, %6 : vector<4x324xf32>
    %c0_6 = arith.constant 0 : index
    %c0_7 = arith.constant 0 : index
    %c0_8 = arith.constant 0 : index
    %8 = vector.load %arg1[%c0_6, %c0_7, %c0_8] : memref<1x4x324xf32, #tpu.memory_space<vmem>>, vector<1x4x324xf32>
    %9 = vector.shape_cast %8 : vector<1x4x324xf32> to vector<4x324xf32>
    %10 = arith.addf %9, %7 : vector<4x324xf32>
    %cst = arith.constant 0.000000e+00 : f32
    %11 = vector.broadcast %cst : f32 to vector<4x324xf32>
    %12 = arith.maximumf %10, %11 : vector<4x324xf32>
    %c0_9 = arith.constant 0 : index
    %c0_10 = arith.constant 0 : index
    %c0_11 = arith.constant 0 : index
    %13 = vector.load %arg5[%c0_9, %c0_10, %c0_11] : memref<1x4x324xf32, #tpu.memory_space<vmem>>, vector<1x4x324xf32>
    %14 = vector.shape_cast %13 : vector<1x4x324xf32> to vector<4x324xf32>
    %15 = vector.shape_cast %12 : vector<4x324xf32> to vector<1x4x324xf32>
    tpu.vector_store %arg5[%c0_9, %c0_10, %c0_11], %15 {strides = array<i32>} : memref<1x4x324xf32, #tpu.memory_space<vmem>>, vector<1x4x324xf32>,
    return
  }
  func.func @transform_0(%arg0: i32) -> (i32, i32, i32) {
    %c0_i32 = arith.constant 0 : i32
    %c0_i32_0 = arith.constant 0 : i32
    %c0_i32_1 = arith.constant 0 : i32
    return %arg0, %c0_i32, %c0_i32_0 : i32, i32, i32
  }
  func.func @transform_1(%arg0: i32) -> (i32, i32, i32) {
    %c0_i32 = arith.constant 0 : i32
    %c0_i32_0 = arith.constant 0 : i32
    %c0_i32_1 = arith.constant 0 : i32
    return %arg0, %c0_i32, %c0_i32_0 : i32, i32, i32
  }
  func.func @transform_2(%arg0: i32) -> (i32, i32) {
    %c0_i32 = arith.constant 0 : i32
    %c0_i32_0 = arith.constant 0 : i32
    %c0_i32_1 = arith.constant 0 : i32
    return %c0_i32, %c0_i32_0 : i32, i32
  }
  func.func @transform_3(%arg0: i32) -> (i32, i32) {
    %c0_i32 = arith.constant 0 : i32
    %c0_i32_0 = arith.constant 0 : i32
    %c0_i32_1 = arith.constant 0 : i32
    return %c0_i32, %c0_i32_0 : i32, i32
  }
  func.func @transform_4(%arg0: i32) -> (i32, i32, i32) {
    %c0_i32 = arith.constant 0 : i32
    %c0_i32_0 = arith.constant 0 : i32
    %c0_i32_1 = arith.constant 0 : i32
    return %arg0, %c0_i32, %c0_i32_0 : i32, i32, i32
  }
}

module attributes {stable_mosaic.version = 11 : i64} {
  func.func @_conv_stats_kernel(%arg0: i32, %arg1: memref<1x4x324xf32, #tpu.memory_space<vmem>>, %arg2: memref<4x1xf32, #tpu.memory_space<vmem>>, %arg3: memref<4x1xf32, #tpu.memory_space<vmem>>, %arg4: memref<4x36xbf16, #tpu.memory_space<vmem>>, %arg5: memref<1x324xf32, #tpu.memory_space<vmem>>, %arg6: memref<1x4x324xf32, #tpu.memory_space<vmem>>, %arg7: memref<1x4x2xf32, #tpu.memory_space<vmem>>, %arg8: memref<4x362xbf16, #tpu.memory_space<vmem>>, %arg9: memref<36x324xbf16, #tpu.memory_space<vmem>>) attributes {dimension_semantics = [#tpu.dimension_semantics<parallel>], iteration_bounds = array<i64: 2>, scalar_prefetch = 0 : i64, scratch_operands = 2 : i64, tpu.core_type = #tpu.core_type<tc>, window_params = [{transform_indices = @transform_0, window_bounds = array<i64: 1, 4, 324>}, {pipeline_mode = #tpu.pipeline_mode<synchronous>, transform_indices = @transform_1, window_bounds = array<i64: 4, 1>}, {pipeline_mode = #tpu.pipeline_mode<synchronous>, transform_indices = @transform_2, window_bounds = array<i64: 4, 1>}, {pipeline_mode = #tpu.pipeline_mode<synchronous>, transform_indices = @transform_3, window_bounds = array<i64: 4, 36>}, {pipeline_mode = #tpu.pipeline_mode<synchronous>, transform_indices = @transform_4, window_bounds = array<i64: 1, 324>}, {transform_indices = @transform_5, window_bounds = array<i64: 1, 4, 324>}, {transform_indices = @transform_6, window_bounds = array<i64: 1, 4, 2>}]} {
    %c0 = arith.constant 0 : index
    %c0_0 = arith.constant 0 : index
    %0 = vector.load %arg5[%c0, %c0_0] : memref<1x324xf32, #tpu.memory_space<vmem>>, vector<1x324xf32>
    %c0_1 = arith.constant 0 : index
    %c0_2 = arith.constant 0 : index
    %c0_3 = arith.constant 0 : index
    %1 = vector.load %arg1[%c0_1, %c0_2, %c0_3] : memref<1x4x324xf32, #tpu.memory_space<vmem>>, vector<1x4x324xf32>
    %2 = vector.shape_cast %1 : vector<1x4x324xf32> to vector<4x324xf32>
    %c0_4 = arith.constant 0 : index
    %c0_5 = arith.constant 0 : index
    %3 = vector.load %arg2[%c0_4, %c0_5] : memref<4x1xf32, #tpu.memory_space<vmem>>, vector<4x1xf32>
    %4 = vector.broadcast %3 : vector<4x1xf32> to vector<4x324xf32>
    %5 = arith.mulf %2, %4 : vector<4x324xf32>
    %c0_6 = arith.constant 0 : index
    %c0_7 = arith.constant 0 : index
    %6 = vector.load %arg3[%c0_6, %c0_7] : memref<4x1xf32, #tpu.memory_space<vmem>>, vector<4x1xf32>
    %7 = vector.broadcast %6 : vector<4x1xf32> to vector<4x324xf32>
    %8 = arith.addf %5, %7 : vector<4x324xf32>
    %cst = arith.constant 0.000000e+00 : f32
    %9 = vector.broadcast %cst : f32 to vector<4x324xf32>
    %10 = arith.maximumf %8, %9 : vector<4x324xf32>
    %11 = vector.broadcast %0 : vector<1x324xf32> to vector<4x324xf32>
    %12 = arith.mulf %10, %11 : vector<4x324xf32>
    %cst_8 = arith.constant 0.000000e+00 : bf16
    %13 = vector.broadcast %cst_8 : bf16 to vector<4x362xbf16>
    %c0_9 = arith.constant 0 : index
    %c0_10 = arith.constant 0 : index
    %14 = vector.load %arg8[%c0_9, %c0_10] : memref<4x362xbf16, #tpu.memory_space<vmem>>, vector<4x362xbf16>
    tpu.vector_store %arg8[%c0_9, %c0_10], %13 {strides = array<i32>} : memref<4x362xbf16, #tpu.memory_space<vmem>>, vector<4x362xbf16>,
    %15 = arith.truncf %12 : vector<4x324xf32> to vector<4x324xbf16>
    %c0_11 = arith.constant 0 : index
    %c19 = arith.constant 19 : index
    %16 = vector.load %arg8[%c0_11, %c19] : memref<4x362xbf16, #tpu.memory_space<vmem>>, vector<4x324xbf16>
    tpu.vector_store %arg8[%c0_11, %c19], %15 {strides = array<i32>} : memref<4x362xbf16, #tpu.memory_space<vmem>>, vector<4x324xbf16>,
    %c0_12 = arith.constant 0 : index
    %c0_13 = arith.constant 0 : index
    %17 = vector.load %arg8[%c0_12, %c0_13] : memref<4x362xbf16, #tpu.memory_space<vmem>>, vector<4x324xbf16>
    %c0_14 = arith.constant 0 : index
    %c0_15 = arith.constant 0 : index
    %18 = vector.load %arg9[%c0_14, %c0_15] : memref<36x324xbf16, #tpu.memory_space<vmem>>, vector<4x324xbf16>
    tpu.vector_store %arg9[%c0_14, %c0_15], %17 {strides = array<i32>} : memref<36x324xbf16, #tpu.memory_space<vmem>>, vector<4x324xbf16>,
    %c0_16 = arith.constant 0 : index
    %c1 = arith.constant 1 : index
    %19 = vector.load %arg8[%c0_16, %c1] : memref<4x362xbf16, #tpu.memory_space<vmem>>, vector<4x324xbf16>
    %c4 = arith.constant 4 : index
    %c0_17 = arith.constant 0 : index
    %20 = vector.load %arg9[%c4, %c0_17] : memref<36x324xbf16, #tpu.memory_space<vmem>>, vector<4x324xbf16>
    tpu.vector_store %arg9[%c4, %c0_17], %19 {strides = array<i32>} : memref<36x324xbf16, #tpu.memory_space<vmem>>, vector<4x324xbf16>,
    %c0_18 = arith.constant 0 : index
    %c2 = arith.constant 2 : index
    %21 = vector.load %arg8[%c0_18, %c2] : memref<4x362xbf16, #tpu.memory_space<vmem>>, vector<4x324xbf16>
    %c8 = arith.constant 8 : index
    %c0_19 = arith.constant 0 : index
    %22 = vector.load %arg9[%c8, %c0_19] : memref<36x324xbf16, #tpu.memory_space<vmem>>, vector<4x324xbf16>
    tpu.vector_store %arg9[%c8, %c0_19], %21 {strides = array<i32>} : memref<36x324xbf16, #tpu.memory_space<vmem>>, vector<4x324xbf16>,
    %c0_20 = arith.constant 0 : index
    %c18 = arith.constant 18 : index
    %23 = vector.load %arg8[%c0_20, %c18] : memref<4x362xbf16, #tpu.memory_space<vmem>>, vector<4x324xbf16>
    %c12 = arith.constant 12 : index
    %c0_21 = arith.constant 0 : index
    %24 = vector.load %arg9[%c12, %c0_21] : memref<36x324xbf16, #tpu.memory_space<vmem>>, vector<4x324xbf16>
    tpu.vector_store %arg9[%c12, %c0_21], %23 {strides = array<i32>} : memref<36x324xbf16, #tpu.memory_space<vmem>>, vector<4x324xbf16>,
    %c0_22 = arith.constant 0 : index
    %c19_23 = arith.constant 19 : index
    %25 = vector.load %arg8[%c0_22, %c19_23] : memref<4x362xbf16, #tpu.memory_space<vmem>>, vector<4x324xbf16>
    %c16 = arith.constant 16 : index
    %c0_24 = arith.constant 0 : index
    %26 = vector.load %arg9[%c16, %c0_24] : memref<36x324xbf16, #tpu.memory_space<vmem>>, vector<4x324xbf16>
    tpu.vector_store %arg9[%c16, %c0_24], %25 {strides = array<i32>} : memref<36x324xbf16, #tpu.memory_space<vmem>>, vector<4x324xbf16>,
    %c0_25 = arith.constant 0 : index
    %c20 = arith.constant 20 : index
    %27 = vector.load %arg8[%c0_25, %c20] : memref<4x362xbf16, #tpu.memory_space<vmem>>, vector<4x324xbf16>
    %c20_26 = arith.constant 20 : index
    %c0_27 = arith.constant 0 : index
    %28 = vector.load %arg9[%c20_26, %c0_27] : memref<36x324xbf16, #tpu.memory_space<vmem>>, vector<4x324xbf16>
    tpu.vector_store %arg9[%c20_26, %c0_27], %27 {strides = array<i32>} : memref<36x324xbf16, #tpu.memory_space<vmem>>, vector<4x324xbf16>,
    %c0_28 = arith.constant 0 : index
    %c36 = arith.constant 36 : index
    %29 = vector.load %arg8[%c0_28, %c36] : memref<4x362xbf16, #tpu.memory_space<vmem>>, vector<4x324xbf16>
    %c24 = arith.constant 24 : index
    %c0_29 = arith.constant 0 : index
    %30 = vector.load %arg9[%c24, %c0_29] : memref<36x324xbf16, #tpu.memory_space<vmem>>, vector<4x324xbf16>
    tpu.vector_store %arg9[%c24, %c0_29], %29 {strides = array<i32>} : memref<36x324xbf16, #tpu.memory_space<vmem>>, vector<4x324xbf16>,
    %c0_30 = arith.constant 0 : index
    %c37 = arith.constant 37 : index
    %31 = vector.load %arg8[%c0_30, %c37] : memref<4x362xbf16, #tpu.memory_space<vmem>>, vector<4x324xbf16>
    %c28 = arith.constant 28 : index
    %c0_31 = arith.constant 0 : index
    %32 = vector.load %arg9[%c28, %c0_31] : memref<36x324xbf16, #tpu.memory_space<vmem>>, vector<4x324xbf16>
    tpu.vector_store %arg9[%c28, %c0_31], %31 {strides = array<i32>} : memref<36x324xbf16, #tpu.memory_space<vmem>>, vector<4x324xbf16>,
    %c0_32 = arith.constant 0 : index
    %c38 = arith.constant 38 : index
    %33 = vector.load %arg8[%c0_32, %c38] : memref<4x362xbf16, #tpu.memory_space<vmem>>, vector<4x324xbf16>
    %c32 = arith.constant 32 : index
    %c0_33 = arith.constant 0 : index
    %34 = vector.load %arg9[%c32, %c0_33] : memref<36x324xbf16, #tpu.memory_space<vmem>>, vector<4x324xbf16>
    tpu.vector_store %arg9[%c32, %c0_33], %33 {strides = array<i32>} : memref<36x324xbf16, #tpu.memory_space<vmem>>, vector<4x324xbf16>,
    %c0_34 = arith.constant 0 : index
    %c0_35 = arith.constant 0 : index
    %35 = vector.load %arg4[%c0_34, %c0_35] : memref<4x36xbf16, #tpu.memory_space<vmem>>, vector<4x36xbf16>
    %c0_36 = arith.constant 0 : index
    %c0_37 = arith.constant 0 : index
    %36 = vector.load %arg9[%c0_36, %c0_37] : memref<36x324xbf16, #tpu.memory_space<vmem>>, vector<36x324xbf16>
    %cst_38 = arith.constant dense<0.000000e+00> : vector<4x324xf32>
    %37 = tpu.matmul %35, %36, %cst_38 {dimension_numbers = #tpu.dot_dimension_numbers<[1], [0], [0], [1], [0, 0, 1, 1], [], []>} : vector<4x36xbf16>, vector<36x324xbf16>, vector<4x324xf32> -> vector<4x324xf32>
    %c0_39 = arith.constant 0 : index
    %c0_40 = arith.constant 0 : index
    %c0_41 = arith.constant 0 : index
    %38 = vector.load %arg6[%c0_39, %c0_40, %c0_41] : memref<1x4x324xf32, #tpu.memory_space<vmem>>, vector<1x4x324xf32>
    %39 = vector.shape_cast %38 : vector<1x4x324xf32> to vector<4x324xf32>
    %40 = vector.shape_cast %37 : vector<4x324xf32> to vector<1x4x324xf32>
    tpu.vector_store %arg6[%c0_39, %c0_40, %c0_41], %40 {strides = array<i32>} : memref<1x4x324xf32, #tpu.memory_space<vmem>>, vector<1x4x324xf32>,
    %41 = vector.broadcast %0 : vector<1x324xf32> to vector<4x324xf32>
    %42 = arith.mulf %37, %41 : vector<4x324xf32>
    %cst_42 = arith.constant dense<0.000000e+00> : vector<4xf32>
    %43 = vector.multi_reduction <add>, %42, %cst_42 [1] : vector<4x324xf32> to vector<4xf32>
    %44 = vector.shape_cast %43 : vector<4xf32> to vector<4x1xf32>
    %c0_43 = arith.constant 0 : index
    %c0_44 = arith.constant 0 : index
    %c0_45 = arith.constant 0 : index
    %45 = vector.load %arg7[%c0_43, %c0_44, %c0_45] : memref<1x4x2xf32, #tpu.memory_space<vmem>>, vector<1x4x1xf32>
    %46 = vector.shape_cast %45 : vector<1x4x1xf32> to vector<4x1xf32>
    %47 = vector.shape_cast %44 : vector<4x1xf32> to vector<1x4x1xf32>
    tpu.vector_store %arg7[%c0_43, %c0_44, %c0_45], %47 {strides = array<i32>} : memref<1x4x2xf32, #tpu.memory_space<vmem>>, vector<1x4x1xf32>,
    %48 = arith.mulf %42, %37 : vector<4x324xf32>
    %cst_46 = arith.constant dense<0.000000e+00> : vector<4xf32>
    %49 = vector.multi_reduction <add>, %48, %cst_46 [1] : vector<4x324xf32> to vector<4xf32>
    %50 = vector.shape_cast %49 : vector<4xf32> to vector<4x1xf32>
    %c0_47 = arith.constant 0 : index
    %c0_48 = arith.constant 0 : index
    %c1_49 = arith.constant 1 : index
    %51 = vector.load %arg7[%c0_47, %c0_48, %c1_49] : memref<1x4x2xf32, #tpu.memory_space<vmem>>, vector<1x4x1xf32>
    %52 = vector.shape_cast %51 : vector<1x4x1xf32> to vector<4x1xf32>
    %53 = vector.shape_cast %50 : vector<4x1xf32> to vector<1x4x1xf32>
    tpu.vector_store %arg7[%c0_47, %c0_48, %c1_49], %53 {strides = array<i32>} : memref<1x4x2xf32, #tpu.memory_space<vmem>>, vector<1x4x1xf32>,
    return
  }
  func.func @transform_0(%arg0: i32) -> (i32, i32, i32) {
    %c0_i32 = arith.constant 0 : i32
    %c0_i32_0 = arith.constant 0 : i32
    %c0_i32_1 = arith.constant 0 : i32
    return %arg0, %c0_i32, %c0_i32_0 : i32, i32, i32
  }
  func.func @transform_1(%arg0: i32) -> (i32, i32) {
    %c0_i32 = arith.constant 0 : i32
    %c0_i32_0 = arith.constant 0 : i32
    %c0_i32_1 = arith.constant 0 : i32
    return %c0_i32, %c0_i32_0 : i32, i32
  }
  func.func @transform_2(%arg0: i32) -> (i32, i32) {
    %c0_i32 = arith.constant 0 : i32
    %c0_i32_0 = arith.constant 0 : i32
    %c0_i32_1 = arith.constant 0 : i32
    return %c0_i32, %c0_i32_0 : i32, i32
  }
  func.func @transform_3(%arg0: i32) -> (i32, i32) {
    %c0_i32 = arith.constant 0 : i32
    %c0_i32_0 = arith.constant 0 : i32
    %c0_i32_1 = arith.constant 0 : i32
    return %c0_i32, %c0_i32_0 : i32, i32
  }
  func.func @transform_4(%arg0: i32) -> (i32, i32) {
    %c0_i32 = arith.constant 0 : i32
    %c0_i32_0 = arith.constant 0 : i32
    %c0_i32_1 = arith.constant 0 : i32
    return %c0_i32, %c0_i32_0 : i32, i32
  }
  func.func @transform_5(%arg0: i32) -> (i32, i32, i32) {
    %c0_i32 = arith.constant 0 : i32
    %c0_i32_0 = arith.constant 0 : i32
    %c0_i32_1 = arith.constant 0 : i32
    return %arg0, %c0_i32, %c0_i32_0 : i32, i32, i32
  }
  func.func @transform_6(%arg0: i32) -> (i32, i32, i32) {
    %c0_i32 = arith.constant 0 : i32
    %c0_i32_0 = arith.constant 0 : i32
    %c0_i32_1 = arith.constant 0 : i32
    return %arg0, %c0_i32, %c0_i32_0 : i32, i32, i32
  }
}

</mosaic_0001>

<llo_original>
// kernel: resblock_forward.5
$region0: #{resblock_forward.5}
  #allocation0 [shape = 'u32[]', space=smem, size = 0x4, offset = 0x4, fixed_abs, tag = 'smem constant byte address 0x4 - core index']
  #allocation1 [shape = 'u32[72,128]{1,0:T(1,128)}', space=vmem, size = 0x9000, scoped, tag = 'internal scratch']
  %s0 = inlined_call_operand.vmem [shape: f32[2,4,324], index: 0, kind: input, shape index: {}]
  %s1 = inlined_call_operand.vmem [shape: f32[2,4,324], index: 1, kind: input, shape index: {}]
  %s2 = inlined_call_operand.vmem [shape: f32[4,1], index: 2, kind: input, shape index: {}]
  %s3 = inlined_call_operand.vmem [shape: f32[4,1], index: 3, kind: input, shape index: {}]
  %s4 = inlined_call_operand.vmem [shape: f32[2,4,324], index: 4, kind: output, shape index: {}]
  %s5 = sld [smem:[#allocation0]]
  $region49: #{resblock_forward.5} parent=0
    _
  %s7 = ssub.s32 1, %s5
  %s8 = scalar_select 0, %s7, %s5
  loop: start=0, step=1, limit=4
  $region2: #{resblock_forward.5} parent=0 // loop_pre_header
    _
  $region3: #{resblock_forward.5} parent=0 // loop_header
    %s10 = sphi 0, %s14
    %p11 = scmp.ge.s32.totalorder %s10, 4
    %s20 = sphi 0, %s22
    %s23 = sphi 0, %s20
    %s24 = sphi 0, %s23
    %s40 = sphi 0, %s24
    %s46 = sphi 0, %s48
    %s49 = sphi 0, %s46
    %s50 = sphi 0, %s49
    %s66 = sphi 0, %s50
    %s70 = sphi 0, %s70
    %s72 = sphi 0, %s70
    %s73 = sphi 0, %s72
    %s87 = sphi 0, %s73
    %s91 = sphi 0, %s91
    %s93 = sphi 0, %s91
    %s94 = sphi 0, %s93
    %s108 = sphi 0, %s94
    %s114 = sphi 0, %s116
    %s117 = sphi 0, %s114
    %s118 = sphi 0, %s117
    %s134 = sphi 0, %s118
  $region4: #{resblock_forward.5} parent=0 // loop_header_branch
    %13 = sbr.rel (%p11) target = $region8
  $region5: #{resblock_forward.5} parent=0 // loop_body
    %s15 = ssub.s32 %s10, 1
    %s16 = ssub.s32 %s10, 2
    %s17 = sadd.s32 %s10, 1
    %s18 = ssub.s32 %s10, %s17
    %p19 = scmp.eq.s32.totalorder %s18, 0
    %s21 = sadd.s32 %s20, 1
    %s22 = scalar_select %p19, %s20, %s21
    %p25 = pneg %p19
    %p26 = scmp.eq.s32.totalorder %s10, 1
    %p27 = por %p25, %p26
    %p28 = scmp.ne.s32.totalorder %s20, %s23
    %p29 = scmp.eq.s32.totalorder %s10, 0
    %p30 = por %p28, %p29
    %p31 = scmp.ne.s32.totalorder %s20, %s23
    %p32 = scmp.eq.s32.totalorder %s15, 1
    %p33 = por %p31, %p32
    %p34 = scmp.ne.s32.totalorder %s23, %s24
    %p35 = scmp.eq.s32.totalorder %s15, 0
    %p36 = por %p34, %p35
    %p37 = scmp.ne.s32.totalorder %s23, %s24
    %p38 = scmp.eq.s32.totalorder %s16, 1
    %p39 = por %p37, %p38
    %p41 = scmp.ne.s32.totalorder %s24, %s40
    %p42 = scmp.eq.s32.totalorder %s16, 0
    %p43 = por %p41, %p42
    %s44 = ssub.s32 %s10, %s17
    %p45 = scmp.eq.s32.totalorder %s44, 0
    %s47 = sadd.s32 %s46, 1
    %s48 = scalar_select %p45, %s46, %s47
    %p51 = pneg %p45
    %p52 = scmp.eq.s32.totalorder %s10, 1
    %p53 = por %p51, %p52
    %p54 = scmp.ne.s32.totalorder %s46, %s49
    %p55 = scmp.eq.s32.totalorder %s10, 0
    %p56 = por %p54, %p55
    %p57 = scmp.ne.s32.totalorder %s46, %s49
    %p58 = scmp.eq.s32.totalorder %s15, 1
    %p59 = por %p57, %p58
    %p60 = scmp.ne.s32.totalorder %s49, %s50
    %p61 = scmp.eq.s32.totalorder %s15, 0
    %p62 = por %p60, %p61
    %p63 = scmp.ne.s32.totalorder %s49, %s50
    %p64 = scmp.eq.s32.totalorder %s16, 1
    %p65 = por %p63, %p64
    %p67 = scmp.ne.s32.totalorder %s50, %s66
    %p68 = scmp.eq.s32.totalorder %s16, 0
    %p69 = por %p67, %p68
    %s71 = sadd.s32 %s70, 1
    %p74 = scmp.eq.s32.totalorder %s10, 1
    %p75 = scmp.ne.s32.totalorder %s70, %s72
    %p76 = scmp.eq.s32.totalorder %s10, 0
    %p77 = por %p75, %p76
    %p78 = scmp.ne.s32.totalorder %s70, %s72
    %p79 = scmp.eq.s32.totalorder %s15, 1
    %p80 = por %p78, %p79
    %p81 = scmp.ne.s32.totalorder %s72, %s73
    %p82 = scmp.eq.s32.totalorder %s15, 0
    %p83 = por %p81, %p82
    %p84 = scmp.ne.s32.totalorder %s72, %s73
    %p85 = scmp.eq.s32.totalorder %s16, 1
    %p86 = por %p84, %p85
    %p88 = scmp.ne.s32.totalorder %s73, %s87
    %p89 = scmp.eq.s32.totalorder %s16, 0
    %p90 = por %p88, %p89
    %s92 = sadd.s32 %s91, 1
    %p95 = scmp.eq.s32.totalorder %s10, 1
    %p96 = scmp.ne.s32.totalorder %s91, %s93
    %p97 = scmp.eq.s32.totalorder %s10, 0
    %p98 = por %p96, %p97
    %p99 = scmp.ne.s32.totalorder %s91, %s93
    %p100 = scmp.eq.s32.totalorder %s15, 1
    %p101 = por %p99, %p100
    %p102 = scmp.ne.s32.totalorder %s93, %s94
    %p103 = scmp.eq.s32.totalorder %s15, 0
    %p104 = por %p102, %p103
    %p105 = scmp.ne.s32.totalorder %s93, %s94
    %p106 = scmp.eq.s32.totalorder %s16, 1
    %p107 = por %p105, %p106
    %p109 = scmp.ne.s32.totalorder %s94, %s108
    %p110 = scmp.eq.s32.totalorder %s16, 0
    %p111 = por %p109, %p110
    %s112 = ssub.s32 %s10, %s17
    %p113 = scmp.eq.s32.totalorder %s112, 0
    %s115 = sadd.s32 %s114, 1
    %s116 = scalar_select %p113, %s114, %s115
    %p119 = pneg %p113
    %p120 = scmp.eq.s32.totalorder %s10, 1
    %p121 = por %p119, %p120
    %p122 = scmp.ne.s32.totalorder %s114, %s117
    %p123 = scmp.eq.s32.totalorder %s10, 0
    %p124 = por %p122, %p123
    %p125 = scmp.ne.s32.totalorder %s114, %s117
    %p126 = scmp.eq.s32.totalorder %s15, 1
    %p127 = por %p125, %p126
    %p128 = scmp.ne.s32.totalorder %s117, %s118
    %p129 = scmp.eq.s32.totalorder %s15, 0
    %p130 = por %p128, %p129
    %p131 = scmp.ne.s32.totalorder %s117, %s118
    %p132 = scmp.eq.s32.totalorder %s16, 1
    %p133 = por %p131, %p132
    %p135 = scmp.ne.s32.totalorder %s118, %s134
    %p136 = scmp.eq.s32.totalorder %s16, 0
    %p137 = por %p135, %p136
    %p138 = scmp.le.s32.totalorder 1, %s10
    %p139 = scmp.lt.s32.totalorder %s10, 3
    %p140 = pnand %p138, %p139
    %p141 = pneg %p140
    // Predicated region
    $region9: #{resblock_forward.5} parent=5 // pred_check
      _
    $region10: #{resblock_forward.5} parent=5 // pred_check_branch
      %143 = sbr.rel (%p140) target = $region12
    $region11: #{resblock_forward.5} parent=5 // pred_region
      %s144 = ssub.s32 %s10, 1
      // Predicated region
      $region13: #{resblock_forward.5} parent=11 // pred_check
        %p145 = pneg %p83
      $region14: #{resblock_forward.5} parent=11 // pred_check_branch
        %147 = sbr.rel (%p145) target = $region16
      $region15: #{resblock_forward.5} parent=11 // pred_region
        _
      $region16: #{resblock_forward.5} parent=11 // pred_fallthru
        _
      // Predicated region
      $region17: #{resblock_forward.5} parent=11 // pred_check
        %p148 = pneg %p104
      $region18: #{resblock_forward.5} parent=11 // pred_check_branch
        %150 = sbr.rel (%p148) target = $region20
      $region19: #{resblock_forward.5} parent=11 // pred_region
        _
      $region20: #{resblock_forward.5} parent=11 // pred_fallthru
        _
    $region12: #{resblock_forward.5} parent=5 // pred_fallthru
      _
    %p151 = scmp.lt.s32.totalorder %s10, 2
    // Predicated region
    $region21: #{resblock_forward.5} parent=5 // pred_check
      %p152 = pneg %p151
    $region22: #{resblock_forward.5} parent=5 // pred_check_branch
      %154 = sbr.rel (%p152) target = $region24
    $region23: #{resblock_forward.5} parent=5 // pred_region
      // Predicated region
      $region25: #{resblock_forward.5} parent=23 // pred_check
        %p155 = pneg %p30
      $region26: #{resblock_forward.5} parent=23 // pred_check_branch
        %157 = sbr.rel (%p155) target = $region28
      $region27: #{resblock_forward.5} parent=23 // pred_region
        %p158 = scmp.lt.s32.totalorder %s10, 1
        %s159 = scalar_select %p158, %s10, 1
        %s160 = smul.addr %s159, 3
        %s161 = smul.addr %s160, 4
        %s162 = scalar_lea.vmem %s0, %s161
      $region28: #{resblock_forward.5} parent=23 // pred_fallthru
        _
      // Predicated region
      $region29: #{resblock_forward.5} parent=23 // pred_check
        %p163 = pneg %p56
      $region30: #{resblock_forward.5} parent=23 // pred_check_branch
        %165 = sbr.rel (%p163) target = $region32
      $region31: #{resblock_forward.5} parent=23 // pred_region
        %p166 = scmp.lt.s32.totalorder %s10, 1
        %s167 = scalar_select %p166, %s10, 1
        %s168 = smul.addr %s167, 3
        %s169 = smul.addr %s168, 4
        %s170 = scalar_lea.vmem %s1, %s169
      $region32: #{resblock_forward.5} parent=23 // pred_fallthru
        _
    $region24: #{resblock_forward.5} parent=5 // pred_fallthru
      _
    %p171 = scmp.le.s32.totalorder 1, %s10
    %p172 = scmp.lt.s32.totalorder %s10, 3
    %p173 = pnand %p171, %p172
    %p174 = pneg %p173
    // Predicated region
    $region33: #{resblock_forward.5} parent=5 // pred_check
      _
    $region34: #{resblock_forward.5} parent=5 // pred_check_branch
      %176 = sbr.rel (%p173) target = $region36
    $region35: #{resblock_forward.5} parent=5 // pred_region
      %s177 = ssub.s32 %s10, 1
      %p178 = scmp.lt.s32.totalorder %s15, 1
      %s179 = scalar_select %p178, %s15, 1
      %s180 = smul.addr %s179, 3
      %s181 = smul.addr %s180, 4
      %s182 = scalar_lea.vmem %s0, %s181
      %p183 = pneg %p36
      %p184 = pneg %p33
      %p185 = scmp.lt.s32.totalorder %s15, 1
      %s186 = scalar_select %p185, %s15, 1
      %s187 = smul.addr %s186, 3
      %s188 = smul.addr %s187, 4
      %s189 = scalar_lea.vmem %s1, %s188
      %p190 = pneg %p62
      %p191 = pneg %p59
      %p192 = pneg %p83
      %p193 = pneg %p80
      %p194 = pneg %p104
      %p195 = pneg %p101
      %p196 = pneg %p130
      %p197 = pneg %p127
      %p198 = scmp.lt.s32.totalorder %s15, 1
      %s199 = scalar_select %p198, %s15, 1
      %s200 = smul.addr %s199, 3
      %s201 = smul.addr %s200, 4
      %s202 = scalar_lea.vmem %s4, %s201
      %p203 = scmp.lt.s32.totalorder %s15, 1
      %s204 = scalar_select %p203, %s15, 1
      %s205 = smul.addr %s204, 3
      %s206 = smul.addr %s205, 4
      %s207 = scalar_lea.vmem %s0, %s206
      %p208 = scmp.lt.s32.totalorder %s15, 1
      %s209 = scalar_select %p208, %s15, 1
      %s210 = smul.addr %s209, 3
      %s211 = smul.addr %s210, 4
      %s212 = scalar_lea.vmem %s1, %s211
      %p213 = scmp.lt.s32.totalorder %s15, 1
      %s214 = scalar_select %p213, %s15, 1
      %s215 = smul.addr %s214, 3
      %s216 = smul.addr %s215, 4
      %s217 = scalar_lea.vmem %s4, %s216
      %v218 = vld [vmem:[%s212] sm:$0xff]
      %v219 = vld [vmem:[%s212 + $0x8] sm:$0xf]
      %v220 = vld [vmem:[%s2] sm:$0xf]
      %222 = vset.pattern.permute.xlu0 0
      %223 = vperm.xlu0 %222, %v220
      %v224 = vpop.permute.xlu0 %223
      %v226 = vunpack.c.l.s4 839922192
      %v227 = vunpack.c.0.s8 %v226
      %v228 = vperm.slane %v224, %v227
      %v230 = vmul.f32 %v218, %v228
      %v231 = vmul.f32 %v219, %v228
      %v232 = vld [vmem:[%s3] sm:$0xf]
      %234 = vset.pattern.permute.xlu0 0
      %235 = vperm.xlu0 %234, %v232
      %v236 = vpop.permute.xlu0 %235
      %v238 = vunpack.c.l.s4 839922192
      %v239 = vunpack.c.0.s8 %v238
      %v240 = vperm.slane %v236, %v239
      %v242 = vadd.f32 %v230, %v240
      %v243 = vadd.f32 %v231, %v240
      %v244 = vld [vmem:[%s207] sm:$0xff]
      %v245 = vld [vmem:[%s207 + $0x8] sm:$0xf]
      %v246 = vadd.f32 %v244, %v242
      %v247 = vadd.f32 %v245, %v243
      %v248 = vmax.f32 %v246, 0.0
      %v249 = vmax.f32 %v247, 0.0
      %250 = vst [vmem:[%s217] sm:$0xff] %v248
      %vm251 = vcmask 551936
      %252 = vst.msk [vmem:[%s217 + $0x8] sm:$0xf] %vm251, %v249
      %p253 = scmp.lt.s32.totalorder %s15, 1
      %s254 = scalar_select %p253, %s15, 1
      %s255 = smul.addr %s254, 3
      %s256 = smul.addr %s255, 4
      %s257 = scalar_lea.vmem %s4, %s256
      // Predicated region
      $region37: #{resblock_forward.5} parent=35 // pred_check
        %p258 = pneg %p127
      $region38: #{resblock_forward.5} parent=35 // pred_check_branch
        %260 = sbr.rel (%p258) target = $region40
      $region39: #{resblock_forward.5} parent=35 // pred_region
        _
      $region40: #{resblock_forward.5} parent=35 // pred_fallthru
        _
    $region36: #{resblock_forward.5} parent=5 // pred_fallthru
      _
    %p261 = scmp.le.s32.totalorder 2, %s10
    // Predicated region
    $region41: #{resblock_forward.5} parent=5 // pred_check
      %p262 = pneg %p261
    $region42: #{resblock_forward.5} parent=5 // pred_check_branch
      %264 = sbr.rel (%p262) target = $region44
    $region43: #{resblock_forward.5} parent=5 // pred_region
      %s265 = ssub.s32 %s10, 2
      // Predicated region
      $region45: #{resblock_forward.5} parent=43 // pred_check
        %p266 = pneg %p133
      $region46: #{resblock_forward.5} parent=43 // pred_check_branch
        %268 = sbr.rel (%p266) target = $region48
      $region47: #{resblock_forward.5} parent=43 // pred_region
        %p269 = scmp.lt.s32.totalorder %s16, 1
        %s270 = scalar_select %p269, %s16, 1
        %s271 = smul.addr %s270, 3
        %s272 = smul.addr %s271, 4
        %s273 = scalar_lea.vmem %s4, %s272
      $region48: #{resblock_forward.5} parent=43 // pred_fallthru
        _
    $region44: #{resblock_forward.5} parent=5 // pred_fallthru
      _
  $region6: #{resblock_forward.5} parent=0 // loop_footer
    %s14 = sadd.s32 1, %s10
  $region7: #{resblock_forward.5} parent=0 // loop_footer_branch
    %9 = sbr.rel target = $region3
  $region8: #{resblock_forward.5} parent=0 // loop_exit
    _

// kernel: resblock_forward.3
$region0: #{resblock_forward.3}
  #allocation0 [shape = 'u32[]', space=smem, size = 0x4, offset = 0x4, fixed_abs, tag = 'smem constant byte address 0x4 - core index']
  #allocation1 [shape = 'u32[72,128]{1,0:T(1,128)}', space=vmem, size = 0x9000, scoped, tag = 'internal scratch']
  #allocation2 [shape = 'bf16[4,362]{1,0:T(4,128)(2,1)}', space=vmem, size = 0xc00, scoped, tag = 'scratch operand']
  #allocation3 [shape = 'bf16[36,324]{1,0:T(8,128)(2,1)}', space=vmem, size = 0x7800, scoped, tag = 'scratch operand']
  %s0 = inlined_call_operand.vmem [shape: f32[2,4,324], index: 0, kind: input, shape index: {}]
  %s1 = inlined_call_operand.vmem [shape: f32[4,1], index: 1, kind: input, shape index: {}]
  %s2 = inlined_call_operand.vmem [shape: f32[4,1], index: 2, kind: input, shape index: {}]
  %s3 = inlined_call_operand.vmem [shape: bf16[4,36], index: 3, kind: input, shape index: {}]
  %s4 = inlined_call_operand.vmem [shape: f32[1,324], index: 4, kind: input, shape index: {}]
  %s5 = inlined_call_operand.vmem [shape: f32[2,4,324], index: 5, kind: output, shape index: {0}]
  %s6 = inlined_call_operand.vmem [shape: f32[2,4,2], index: 6, kind: output, shape index: {1}]
  %7 = xla_tuple %s5, %s6
  %s8 = sld [smem:[#allocation0]]
  $region61: #{resblock_forward.3} parent=0
    _
  %s10 = ssub.s32 1, %s8
  %s11 = scalar_select 0, %s10, %s8
  loop: start=0, step=1, limit=4
  $region2: #{resblock_forward.3} parent=0 // loop_pre_header
    _
  $region3: #{resblock_forward.3} parent=0 // loop_header
    %s13 = sphi 0, %s17
    %p14 = scmp.ge.s32.totalorder %s13, 4
    %s23 = sphi 0, %s25
    %s26 = sphi 0, %s23
    %s27 = sphi 0, %s26
    %s43 = sphi 0, %s27
    %s47 = sphi 0, %s47
    %s49 = sphi 0, %s47
    %s50 = sphi 0, %s49
    %s64 = sphi 0, %s50
    %s68 = sphi 0, %s68
    %s70 = sphi 0, %s68
    %s71 = sphi 0, %s70
    %s85 = sphi 0, %s71
    %s89 = sphi 0, %s89
    %s91 = sphi 0, %s89
    %s92 = sphi 0, %s91
    %s106 = sphi 0, %s92
    %s110 = sphi 0, %s110
    %s112 = sphi 0, %s110
    %s113 = sphi 0, %s112
    %s127 = sphi 0, %s113
    %s133 = sphi 0, %s135
    %s136 = sphi 0, %s133
    %s137 = sphi 0, %s136
    %s153 = sphi 0, %s137
    %s159 = sphi 0, %s161
    %s162 = sphi 0, %s159
    %s163 = sphi 0, %s162
    %s179 = sphi 0, %s163
  $region4: #{resblock_forward.3} parent=0 // loop_header_branch
    %16 = sbr.rel (%p14) target = $region8
  $region5: #{resblock_forward.3} parent=0 // loop_body
    %s18 = ssub.s32 %s13, 1
    %s19 = ssub.s32 %s13, 2
    %s20 = sadd.s32 %s13, 1
    %s21 = ssub.s32 %s13, %s20
    %p22 = scmp.eq.s32.totalorder %s21, 0
    %s24 = sadd.s32 %s23, 1
    %s25 = scalar_select %p22, %s23, %s24
    %p28 = pneg %p22
    %p29 = scmp.eq.s32.totalorder %s13, 1
    %p30 = por %p28, %p29
    %p31 = scmp.ne.s32.totalorder %s23, %s26
    %p32 = scmp.eq.s32.totalorder %s13, 0
    %p33 = por %p31, %p32
    %p34 = scmp.ne.s32.totalorder %s23, %s26
    %p35 = scmp.eq.s32.totalorder %s18, 1
    %p36 = por %p34, %p35
    %p37 = scmp.ne.s32.totalorder %s26, %s27
    %p38 = scmp.eq.s32.totalorder %s18, 0
    %p39 = por %p37, %p38
    %p40 = scmp.ne.s32.totalorder %s26, %s27
    %p41 = scmp.eq.s32.totalorder %s19, 1
    %p42 = por %p40, %p41
    %p44 = scmp.ne.s32.totalorder %s27, %s43
    %p45 = scmp.eq.s32.totalorder %s19, 0
    %p46 = por %p44, %p45
    %s48 = sadd.s32 %s47, 1
    %p51 = scmp.eq.s32.totalorder %s13, 1
    %p52 = scmp.ne.s32.totalorder %s47, %s49
    %p53 = scmp.eq.s32.totalorder %s13, 0
    %p54 = por %p52, %p53
    %p55 = scmp.ne.s32.totalorder %s47, %s49
    %p56 = scmp.eq.s32.totalorder %s18, 1
    %p57 = por %p55, %p56
    %p58 = scmp.ne.s32.totalorder %s49, %s50
    %p59 = scmp.eq.s32.totalorder %s18, 0
    %p60 = por %p58, %p59
    %p61 = scmp.ne.s32.totalorder %s49, %s50
    %p62 = scmp.eq.s32.totalorder %s19, 1
    %p63 = por %p61, %p62
    %p65 = scmp.ne.s32.totalorder %s50, %s64
    %p66 = scmp.eq.s32.totalorder %s19, 0
    %p67 = por %p65, %p66
    %s69 = sadd.s32 %s68, 1
    %p72 = scmp.eq.s32.totalorder %s13, 1
    %p73 = scmp.ne.s32.totalorder %s68, %s70
    %p74 = scmp.eq.s32.totalorder %s13, 0
    %p75 = por %p73, %p74
    %p76 = scmp.ne.s32.totalorder %s68, %s70
    %p77 = scmp.eq.s32.totalorder %s18, 1
    %p78 = por %p76, %p77
    %p79 = scmp.ne.s32.totalorder %s70, %s71
    %p80 = scmp.eq.s32.totalorder %s18, 0
    %p81 = por %p79, %p80
    %p82 = scmp.ne.s32.totalorder %s70, %s71
    %p83 = scmp.eq.s32.totalorder %s19, 1
    %p84 = por %p82, %p83
    %p86 = scmp.ne.s32.totalorder %s71, %s85
    %p87 = scmp.eq.s32.totalorder %s19, 0
    %p88 = por %p86, %p87
    %s90 = sadd.s32 %s89, 1
    %p93 = scmp.eq.s32.totalorder %s13, 1
    %p94 = scmp.ne.s32.totalorder %s89, %s91
    %p95 = scmp.eq.s32.totalorder %s13, 0
    %p96 = por %p94, %p95
    %p97 = scmp.ne.s32.totalorder %s89, %s91
    %p98 = scmp.eq.s32.totalorder %s18, 1
    %p99 = por %p97, %p98
    %p100 = scmp.ne.s32.totalorder %s91, %s92
    %p101 = scmp.eq.s32.totalorder %s18, 0
    %p102 = por %p100, %p101
    %p103 = scmp.ne.s32.totalorder %s91, %s92
    %p104 = scmp.eq.s32.totalorder %s19, 1
    %p105 = por %p103, %p104
    %p107 = scmp.ne.s32.totalorder %s92, %s106
    %p108 = scmp.eq.s32.totalorder %s19, 0
    %p109 = por %p107, %p108
    %s111 = sadd.s32 %s110, 1
    %p114 = scmp.eq.s32.totalorder %s13, 1
    %p115 = scmp.ne.s32.totalorder %s110, %s112
    %p116 = scmp.eq.s32.totalorder %s13, 0
    %p117 = por %p115, %p116
    %p118 = scmp.ne.s32.totalorder %s110, %s112
    %p119 = scmp.eq.s32.totalorder %s18, 1
    %p120 = por %p118, %p119
    %p121 = scmp.ne.s32.totalorder %s112, %s113
    %p122 = scmp.eq.s32.totalorder %s18, 0
    %p123 = por %p121, %p122
    %p124 = scmp.ne.s32.totalorder %s112, %s113
    %p125 = scmp.eq.s32.totalorder %s19, 1
    %p126 = por %p124, %p125
    %p128 = scmp.ne.s32.totalorder %s113, %s127
    %p129 = scmp.eq.s32.totalorder %s19, 0
    %p130 = por %p128, %p129
    %s131 = ssub.s32 %s13, %s20
    %p132 = scmp.eq.s32.totalorder %s131, 0
    %s134 = sadd.s32 %s133, 1
    %s135 = scalar_select %p132, %s133, %s134
    %p138 = pneg %p132
    %p139 = scmp.eq.s32.totalorder %s13, 1
    %p140 = por %p138, %p139
    %p141 = scmp.ne.s32.totalorder %s133, %s136
    %p142 = scmp.eq.s32.totalorder %s13, 0
    %p143 = por %p141, %p142
    %p144 = scmp.ne.s32.totalorder %s133, %s136
    %p145 = scmp.eq.s32.totalorder %s18, 1
    %p146 = por %p144, %p145
    %p147 = scmp.ne.s32.totalorder %s136, %s137
    %p148 = scmp.eq.s32.totalorder %s18, 0
    %p149 = por %p147, %p148
    %p150 = scmp.ne.s32.totalorder %s136, %s137
    %p151 = scmp.eq.s32.totalorder %s19, 1
    %p152 = por %p150, %p151
    %p154 = scmp.ne.s32.totalorder %s137, %s153
    %p155 = scmp.eq.s32.totalorder %s19, 0
    %p156 = por %p154, %p155
    %s157 = ssub.s32 %s13, %s20
    %p158 = scmp.eq.s32.totalorder %s157, 0
    %s160 = sadd.s32 %s159, 1
    %s161 = scalar_select %p158, %s159, %s160
    %p164 = pneg %p158
    %p165 = scmp.eq.s32.totalorder %s13, 1
    %p166 = por %p164, %p165
    %p167 = scmp.ne.s32.totalorder %s159, %s162
    %p168 = scmp.eq.s32.totalorder %s13, 0
    %p169 = por %p167, %p168
    %p170 = scmp.ne.s32.totalorder %s159, %s162
    %p171 = scmp.eq.s32.totalorder %s18, 1
    %p172 = por %p170, %p171
    %p173 = scmp.ne.s32.totalorder %s162, %s163
    %p174 = scmp.eq.s32.totalorder %s18, 0
    %p175 = por %p173, %p174
    %p176 = scmp.ne.s32.totalorder %s162, %s163
    %p177 = scmp.eq.s32.totalorder %s19, 1
    %p178 = por %p176, %p177
    %p180 = scmp.ne.s32.totalorder %s163, %s179
    %p181 = scmp.eq.s32.totalorder %s19, 0
    %p182 = por %p180, %p181
    %p183 = scmp.le.s32.totalorder 1, %s13
    %p184 = scmp.lt.s32.totalorder %s13, 3
    %p185 = pnand %p183, %p184
    %p186 = pneg %p185
    // Predicated region
    $region9: #{resblock_forward.3} parent=5 // pred_check
      _
    $region10: #{resblock_forward.3} parent=5 // pred_check_branch
      %188 = sbr.rel (%p185) target = $region12
    $region11: #{resblock_forward.3} parent=5 // pred_region
      %s189 = ssub.s32 %s13, 1
      // Predicated region
      $region13: #{resblock_forward.3} parent=11 // pred_check
        %p190 = pneg %p60
      $region14: #{resblock_forward.3} parent=11 // pred_check_branch
        %192 = sbr.rel (%p190) target = $region16
      $region15: #{resblock_forward.3} parent=11 // pred_region
        _
      $region16: #{resblock_forward.3} parent=11 // pred_fallthru
        _
      // Predicated region
      $region17: #{resblock_forward.3} parent=11 // pred_check
        %p193 = pneg %p81
      $region18: #{resblock_forward.3} parent=11 // pred_check_branch
        %195 = sbr.rel (%p193) target = $region20
      $region19: #{resblock_forward.3} parent=11 // pred_region
        _
      $region20: #{resblock_forward.3} parent=11 // pred_fallthru
        _
      // Predicated region
      $region21: #{resblock_forward.3} parent=11 // pred_check
        %p196 = pneg %p102
      $region22: #{resblock_forward.3} parent=11 // pred_check_branch
        %198 = sbr.rel (%p196) target = $region24
      $region23: #{resblock_forward.3} parent=11 // pred_region
        _
      $region24: #{resblock_forward.3} parent=11 // pred_fallthru
        _
      // Predicated region
      $region25: #{resblock_forward.3} parent=11 // pred_check
        %p199 = pneg %p123
      $region26: #{resblock_forward.3} parent=11 // pred_check_branch
        %201 = sbr.rel (%p199) target = $region28
      $region27: #{resblock_forward.3} parent=11 // pred_region
        _
      $region28: #{resblock_forward.3} parent=11 // pred_fallthru
        _
    $region12: #{resblock_forward.3} parent=5 // pred_fallthru
      _
    %p202 = scmp.lt.s32.totalorder %s13, 2
    // Predicated region
    $region29: #{resblock_forward.3} parent=5 // pred_check
      %p203 = pneg %p202
    $region30: #{resblock_forward.3} parent=5 // pred_check_branch
      %205 = sbr.rel (%p203) target = $region32
    $region31: #{resblock_forward.3} parent=5 // pred_region
      // Predicated region
      $region33: #{resblock_forward.3} parent=31 // pred_check
        %p206 = pneg %p33
      $region34: #{resblock_forward.3} parent=31 // pred_check_branch
        %208 = sbr.rel (%p206) target = $region36
      $region35: #{resblock_forward.3} parent=31 // pred_region
        %p209 = scmp.lt.s32.totalorder %s13, 1
        %s210 = scalar_select %p209, %s13, 1
        %s211 = smul.addr %s210, 3
        %s212 = smul.addr %s211, 4
        %s213 = scalar_lea.vmem %s0, %s212
      $region36: #{resblock_forward.3} parent=31 // pred_fallthru
        _
    $region32: #{resblock_forward.3} parent=5 // pred_fallthru
      _
    %p214 = scmp.le.s32.totalorder 1, %s13
    %p215 = scmp.lt.s32.totalorder %s13, 3
    %p216 = pnand %p214, %p215
    %p217 = pneg %p216
    // Predicated region
    $region37: #{resblock_forward.3} parent=5 // pred_check
      _
    $region38: #{resblock_forward.3} parent=5 // pred_check_branch
      %219 = sbr.rel (%p216) target = $region40
    $region39: #{resblock_forward.3} parent=5 // pred_region
      %s220 = ssub.s32 %s13, 1
      %p221 = scmp.lt.s32.totalorder %s18, 1
      %s222 = scalar_select %p221, %s18, 1
      %s223 = smul.addr %s222, 3
      %s224 = smul.addr %s223, 4
      %s225 = scalar_lea.vmem %s0, %s224
      %p226 = pneg %p39
      %p227 = pneg %p36
      %p228 = pneg %p60
      %p229 = pneg %p57
      %p230 = pneg %p81
      %p231 = pneg %p78
      %p232 = pneg %p102
      %p233 = pneg %p99
      %p234 = pneg %p123
      %p235 = pneg %p120
      %p236 = pneg %p149
      %p237 = pneg %p146
      %p238 = scmp.lt.s32.totalorder %s18, 1
      %s239 = scalar_select %p238, %s18, 1
      %s240 = smul.addr %s239, 3
      %s241 = smul.addr %s240, 4
      %s242 = scalar_lea.vmem %s5, %s241
      %p243 = pneg %p175
      %p244 = pneg %p172
      %p245 = scmp.lt.s32.totalorder %s18, 1
      %s246 = scalar_select %p245, %s18, 1
      %s247 = smul.addr %s246, 4
      %s248 = scalar_lea.vmem %s6, %s247
      %p249 = scmp.lt.s32.totalorder %s18, 1
      %s250 = scalar_select %p249, %s18, 1
      %s251 = smul.addr %s250, 3
      %s252 = smul.addr %s251, 4
      %s253 = scalar_lea.vmem %s0, %s252
      %p254 = scmp.lt.s32.totalorder %s18, 1
      %s255 = scalar_select %p254, %s18, 1
      %s256 = smul.addr %s255, 3
      %s257 = smul.addr %s256, 4
      %s258 = scalar_lea.vmem %s5, %s257
      %p259 = scmp.lt.s32.totalorder %s18, 1
      %s260 = scalar_select %p259, %s18, 1
      %s261 = smul.addr %s260, 4
      %s262 = scalar_lea.vmem %s6, %s261
      %v264 = vld [vmem:[%s4] sm:$0x7]
      %v265 = vld [vmem:[%s253] sm:$0xff]
      %v266 = vld [vmem:[%s253 + $0x8] sm:$0xf]
      %v267 = vld [vmem:[%s1] sm:$0xf]
      %269 = vset.pattern.permute.xlu0 0
      %270 = vperm.xlu0 %269, %v267
      %v271 = vpop.permute.xlu0 %270
      %v273 = vunpack.c.l.s4 839922192
      %v274 = vunpack.c.0.s8 %v273
      %v275 = vperm.slane %v271, %v274
      %v277 = vmul.f32 %v265, %v275
      %v278 = vmul.f32 %v266, %v275
      %v279 = vld [vmem:[%s2] sm:$0xf]
      %281 = vset.pattern.permute.xlu0 0
      %282 = vperm.xlu0 %281, %v279
      %v283 = vpop.permute.xlu0 %282
      %v285 = vunpack.c.l.s4 839922192
      %v286 = vunpack.c.0.s8 %v285
      %v287 = vperm.slane %v283, %v286
      %v289 = vadd.f32 %v277, %v287
      %v290 = vadd.f32 %v278, %v287
      %v292 = vperm.slane %v264, 0
      %v293 = vperm.slane %v264, 1
      %v294 = vperm.slane %v264, 2
      %v298 = vrot.slane %v293, 4
      %vm299 = vcmask 1043456
      %v300 = vsel %vm299, %v292, %v298
      %v302 = vmul.f32 %v289, %v300
      %v303 = vmul.f32 %v290, %v294
      %vm304 = vcmask 1041408
      %vm305 = vcmask 1043458
      %vm306 = vmor %vm305, %vm304
      %vm307 = vcmask 865284
      %vm308 = vmor %vm307, %vm306
      %309 = vst.msk [vmem:[#allocation2] sm:$0x3f] %vm308, 0
      %312 = vst [vmem:[#allocation1] ss:$2 sm:$0xff] %v302
      %s313 = scalar_lea.vmem [#allocation1], 16
      %314 = vst [vmem:[%s313] ss:$2 sm:$0xff] %v303
      %v315 = vld.sshfl [vmem:[#allocation1] sm:$0xff pattern:$0x75316420]
      %v316 = vld.sshfl [vmem:[#allocation1 + $0x8] sm:$0xff pattern:$0x75316420]
      %v317 = vld.sshfl [vmem:[#allocation1 + $0x10] sm:$0xff pattern:$0x75316420]
      %v321 = vpack.c.bf16 %v316, %v315
      %v322 = vpack.c.bf16 %v317, %v317
      %v325 = vrot.slane %v321, 2
      %v326 = vrot.slane %v322, 4
      %v327 = vrot.slane %v322, 6
      %v330 = vsel %vm304, %v321, %v325
      %vm331 = vcmask 1045508
      %v334 = vsel %vm331, %v326, %v327
      %v335 = vsel %vm299, %v330, %v334
      %337 = vrot.lane.b32.xlu0 %v335, 19
      %v338 = vpop.permute.xlu0 %337
      %v339 = vrot.slane %v338, 6
      %vm340 = vcmask 154624
      %v341 = vsel %vm340, %v339, %v338
      %vm343 = vcmask 1041560
      %vm344 = vmor %vm305, %vm343
      %vm345 = vcmask 709636
      %vm346 = vmor %vm345, %vm344
      %347 = vst.msk [vmem:[#allocation2] sm:$0x3f] %vm346, %v341
      %v348 = vld [vmem:[#allocation2] sm:$0x3f]
      %350 = vst [vmem:[#allocation1] ss:$2 sm:$0xff] %v348
      %v351 = vld.sshfl [vmem:[#allocation1] sm:$0xff pattern:$0x75643120]
      %v352 = vld.sshfl [vmem:[#allocation1 + $0x8] sm:$0xff pattern:$0x75643120]
      %355 = vst [vmem:[#allocation3] sm:$0x33] %v351
      %vm356 = vcmask 549888
      %357 = vst.msk [vmem:[#allocation3 + $0x8] sm:$0x3] %vm356, %v352
      %v358 = vld [vmem:[#allocation2] sm:$0x3f]
      %s360 = scalar_lea.vmem [#allocation1], 1
      %361 = vst [vmem:[%s360] ss:$2 sm:$0xff] %v358
      %v362 = vld.sshfl [vmem:[#allocation1] sm:$0xff pattern:$0x75643120]
      %v364 = vld.sshfl [vmem:[#allocation1 + $0x8] sm:$0xff pattern:$0x75643120]
      %366 = vrot.lane.b32.xlu0 %v362, 127
      %v367 = vpop.permute.xlu0 %366
      %368 = vrot.lane.b32.xlu0 %v364, 127
      %v369 = vpop.permute.xlu0 %368
      %v370 = vrot.slane %v367, 4
      %v371 = vrot.slane %v369, 4
      %vm372 = vcmask 1043456
      %v373 = vsel %vm372, %v370, %v371
      %vm374 = vcmask 1039360
      %v375 = vsel %vm374, %v367, %v373
      %378 = vst [vmem:[#allocation3] sm:$0xcc] %v375
      %vm379 = vcmask 551938
      %380 = vst.msk [vmem:[#allocation3 + $0x8] sm:$0xc] %vm379, %v369
      %v381 = vld [vmem:[#allocation2] sm:$0x3f]
      %383 = vst [vmem:[#allocation1] ss:$2 sm:$0xff] %v381
      %v384 = vld.sshfl [vmem:[#allocation1] sm:$0xff pattern:$0x75643120]
      %v386 = vld.sshfl [vmem:[#allocation1 + $0x8] sm:$0xff pattern:$0x75643120]
      %388 = vrot.lane.b32.xlu0 %v384, 126
      %v389 = vpop.permute.xlu0 %388
      %390 = vrot.lane.b32.xlu0 %v386, 126
      %v391 = vpop.permute.xlu0 %390
      %v392 = vrot.slane %v389, 4
      %v393 = vrot.slane %v391, 4
      %v394 = vsel %vm372, %v392, %v393
      %vm395 = vcmask 1031168
      %v396 = vsel %vm395, %v389, %v394
      %399 = vst [vmem:[#allocation3 + $0xc] sm:$0x33] %v396
      %400 = vst.msk [vmem:[#allocation3 + $0x14] sm:$0x3] %vm356, %v391
      %v401 = vld [vmem:[#allocation2] sm:$0x3f]
      %s403 = scalar_lea.vmem [#allocation1], 1
      %404 = vst [vmem:[%s403] ss:$2 sm:$0xff] %v401
      %v405 = vld.sshfl [vmem:[#allocation1] sm:$0xff pattern:$0x75643120]
      %v407 = vld.sshfl [vmem:[#allocation1 + $0x8] sm:$0xff pattern:$0x75643120]
      %409 = vrot.lane.b32.xlu0 %v405, 110
      %v410 = vpop.permute.xlu0 %409
      %411 = vrot.lane.b32.xlu0 %v407, 110
      %v412 = vpop.permute.xlu0 %411
      %v413 = vrot.slane %v410, 4
      %v414 = vrot.slane %v412, 4
      %v415 = vsel %vm372, %v413, %v414
      %vm416 = vcmask 900096
      %v417 = vsel %vm416, %v410, %v415
      %420 = vst [vmem:[#allocation3 + $0xc] sm:$0xcc] %v417
      %421 = vst.msk [vmem:[#allocation3 + $0x14] sm:$0xc] %vm379, %v412
      %v422 = vld [vmem:[#allocation2] sm:$0x3f]
      %424 = vst [vmem:[#allocation1] ss:$2 sm:$0xff] %v422
      %v425 = vld.sshfl [vmem:[#allocation1] sm:$0xff pattern:$0x75643120]
      %v427 = vld.sshfl [vmem:[#allocation1 + $0x8] sm:$0xff pattern:$0x75643120]
      %429 = vrot.lane.b32.xlu0 %v425, 109
      %v430 = vpop.permute.xlu0 %429
      %431 = vrot.lane.b32.xlu0 %v427, 109
      %v432 = vpop.permute.xlu0 %431
      %v433 = vrot.slane %v430, 4
      %v434 = vrot.slane %v432, 4
      %v435 = vsel %vm372, %v433, %v434
      %vm436 = vcmask 891904
      %v437 = vsel %vm436, %v430, %v435
      %440 = vst [vmem:[#allocation3 + $0x18] sm:$0x33] %v437
      %441 = vst.msk [vmem:[#allocation3 + $0x20] sm:$0x3] %vm356, %v432
      %v442 = vld [vmem:[#allocation2] sm:$0x3f]
      %s444 = scalar_lea.vmem [#allocation1], 1
      %445 = vst [vmem:[%s444] ss:$2 sm:$0xff] %v442
      %v446 = vld.sshfl [vmem:[#allocation1] sm:$0xff pattern:$0x75643120]
      %v448 = vld.sshfl [vmem:[#allocation1 + $0x8] sm:$0xff pattern:$0x75643120]
      %450 = vrot.lane.b32.xlu0 %v446, 108
      %v451 = vpop.permute.xlu0 %450
      %452 = vrot.lane.b32.xlu0 %v448, 108
      %v453 = vpop.permute.xlu0 %452
      %v454 = vrot.slane %v451, 4
      %v455 = vrot.slane %v453, 4
      %v456 = vsel %vm372, %v454, %v455
      %vm457 = vcmask 883712
      %v458 = vsel %vm457, %v451, %v456
      %461 = vst [vmem:[#allocation3 + $0x18] sm:$0xcc] %v458
      %462 = vst.msk [vmem:[#allocation3 + $0x20] sm:$0xc] %vm379, %v453
      %v463 = vld [vmem:[#allocation2] sm:$0x3f]
      %465 = vst [vmem:[#allocation1] ss:$2 sm:$0xff] %v463
      %v466 = vld.sshfl [vmem:[#allocation1] sm:$0xff pattern:$0x75643120]
      %v468 = vld.sshfl [vmem:[#allocation1 + $0x8] sm:$0xff pattern:$0x75643120]
      %470 = vrot.lane.b32.xlu0 %v466, 92
      %v471 = vpop.permute.xlu0 %470
      %472 = vrot.lane.b32.xlu0 %v468, 92
      %v473 = vpop.permute.xlu0 %472
      %v474 = vrot.slane %v471, 4
      %v475 = vrot.slane %v473, 4
      %v476 = vsel %vm372, %v474, %v475
      %vm477 = vcmask 752640
      %v478 = vsel %vm477, %v471, %v476
      %481 = vst [vmem:[#allocation3 + $0x24] sm:$0x33] %v478
      %482 = vst.msk [vmem:[#allocation3 + $0x2c] sm:$0x3] %vm356, %v473
      %v483 = vld [vmem:[#allocation2] sm:$0x3f]
      %s485 = scalar_lea.vmem [#allocation1], 1
      %486 = vst [vmem:[%s485] ss:$2 sm:$0xff] %v483
      %v487 = vld.sshfl [vmem:[#allocation1] sm:$0xff pattern:$0x75643120]
      %v489 = vld.sshfl [vmem:[#allocation1 + $0x8] sm:$0xff pattern:$0x75643120]
      %491 = vrot.lane.b32.xlu0 %v487, 91
      %v492 = vpop.permute.xlu0 %491
      %493 = vrot.lane.b32.xlu0 %v489, 91
      %v494 = vpop.permute.xlu0 %493
      %v495 = vrot.slane %v492, 4
      %v496 = vrot.slane %v494, 4
      %v497 = vsel %vm372, %v495, %v496
      %vm498 = vcmask 744448
      %v499 = vsel %vm498, %v492, %v497
      %502 = vst [vmem:[#allocation3 + $0x24] sm:$0xcc] %v499
      %503 = vst.msk [vmem:[#allocation3 + $0x2c] sm:$0xc] %vm379, %v494
      %v504 = vld [vmem:[#allocation2] sm:$0x3f]
      %506 = vst [vmem:[#allocation1] ss:$2 sm:$0xff] %v504
      %v507 = vld.sshfl [vmem:[#allocation1] sm:$0xff pattern:$0x75643120]
      %v509 = vld.sshfl [vmem:[#allocation1 + $0x8] sm:$0xff pattern:$0x75643120]
      %511 = vrot.lane.b32.xlu0 %v507, 90
      %v512 = vpop.permute.xlu0 %511
      %513 = vrot.lane.b32.xlu0 %v509, 90
      %v514 = vpop.permute.xlu0 %513
      %v515 = vrot.slane %v512, 4
      %v516 = vrot.slane %v514, 4
      %v517 = vsel %vm372, %v515, %v516
      %vm518 = vcmask 736256
      %v519 = vsel %vm518, %v512, %v517
      %522 = vst [vmem:[#allocation3 + $0x30] sm:$0x33] %v519
      %523 = vst.msk [vmem:[#allocation3 + $0x38] sm:$0x3] %vm356, %v514
      %v524 = vld [vmem:[%s3] sm:$0x3]
      %v525 = vld [vmem:[#allocation3] sm:$0xff]
      %v526 = vld [vmem:[#allocation3 + $0x8] sm:$0xf]
      %v527 = vld [vmem:[#allocation3 + $0xc] sm:$0xff]
      %v528 = vld [vmem:[#allocation3 + $0x14] sm:$0xf]
      %v529 = vld [vmem:[#allocation3 + $0x18] sm:$0xff]
      %v530 = vld [vmem:[#allocation3 + $0x20] sm:$0xf]
      %v531 = vld [vmem:[#allocation3 + $0x24] sm:$0xff]
      %v532 = vld [vmem:[#allocation3 + $0x2c] sm:$0xf]
      %v533 = vld [vmem:[#allocation3 + $0x30] sm:$0x33]
      %v534 = vld [vmem:[#allocation3 + $0x38] sm:$0x3]
      %v545 = vunpack.c.l.b16 %v525
      %v546 = vunpack.c.h.b16 %v525
      %v547 = vunpack.c.l.b16 %v526
      %v548 = vunpack.c.l.b16 %v527
      %v549 = vunpack.c.h.b16 %v527
      %v550 = vunpack.c.l.b16 %v528
      %v551 = vunpack.c.l.b16 %v529
      %v552 = vunpack.c.h.b16 %v529
      %v553 = vunpack.c.l.b16 %v530
      %v554 = vunpack.c.l.b16 %v531
      %v555 = vunpack.c.h.b16 %v531
      %v556 = vunpack.c.l.b16 %v532
      %v557 = vunpack.c.l.b16 %v533
      %v558 = vunpack.c.h.b16 %v533
      %v559 = vunpack.c.l.b16 %v534
      %v560 = vpack.c.b16 %v548, %v545
      %v561 = vpack.c.b16 %v549, %v546
      %v562 = vpack.c.b16 %v550, %v547
      %v563 = vpack.c.b16 %v554, %v551
      %v564 = vpack.c.b16 %v555, %v552
      %v565 = vpack.c.b16 %v556, %v553
      %v566 = vpack.c.b16 %v557, %v557
      %v567 = vpack.c.b16 %v558, %v558
      %v568 = vpack.c.b16 %v559, %v559
      %vm575 = vcmask 293888
      %v577 = vsel %vm575, %v524, 0
      %v580 = vsel %vm304, %v566, 0
      %v583 = vsel %vm304, %v567, 0
      %v586 = vsel %vm304, %v568, 0
      %588 = vmatpush.bf16.msra.mxu0 0
      %589 = vmatpush.bf16.msra.mxu0 0
      %590 = vmatpush.bf16.msra.mxu0 0
      %591 = vmatpush.bf16.msra.mxu0 0
      %592 = vmatpush.bf16.msra.mxu0 0
      %593 = vmatpush.bf16.msra.mxu0 %v580
      %594 = vmatpush.bf16.msra.mxu0 %v563
      %595 = vmatpush.bf16.msra.mxu0 %v560
      %596 = vmatmul.bf16.gmra.mxu0 %v577
      %v597 = vpop.f32.mrf.mxu0
      %v598 = vadd.f32 0.0, %v597
      %v599 = vpop.f32.mrf.mxu0
      %600 = vdwg.mxu0
      %601 = vmatpush.bf16.msra.mxu0 0
      %602 = vmatpush.bf16.msra.mxu0 0
      %603 = vmatpush.bf16.msra.mxu0 0
      %604 = vmatpush.bf16.msra.mxu0 0
      %605 = vmatpush.bf16.msra.mxu0 0
      %606 = vmatpush.bf16.msra.mxu0 %v583
      %607 = vmatpush.bf16.msra.mxu0 %v564
      %608 = vmatpush.bf16.msra.mxu0 %v561
      %609 = vmatmul.bf16.gmra.mxu0 %v577
      %v610 = vpop.f32.mrf.mxu0
      %v611 = vadd.f32 0.0, %v610
      %v612 = vpop.f32.mrf.mxu0
      %613 = vdwg.mxu0
      %614 = vmatpush.bf16.msra.mxu0 0
      %615 = vmatpush.bf16.msra.mxu0 0
      %616 = vmatpush.bf16.msra.mxu0 0
      %617 = vmatpush.bf16.msra.mxu0 0
      %618 = vmatpush.bf16.msra.mxu0 0
      %619 = vmatpush.bf16.msra.mxu0 %v586
      %620 = vmatpush.bf16.msra.mxu0 %v565
      %621 = vmatpush.bf16.msra.mxu0 %v562
      %622 = vmatmul.bf16.gmra.mxu0 %v577
      %v623 = vpop.f32.mrf.mxu0
      %v624 = vadd.f32 0.0, %v623
      %v625 = vpop.f32.mrf.mxu0
      %626 = vdwg.mxu0
      %v629 = vrot.slane %v611, 4
      %v630 = vsel %vm299, %v598, %v629
      %632 = vst [vmem:[%s258] sm:$0xff] %v630
      %vm633 = vcmask 551936
      %634 = vst.msk [vmem:[%s258 + $0x8] sm:$0xf] %vm633, %v624
      %v635 = vmul.f32 %v598, %v292
      %v636 = vmul.f32 %v611, %v293
      %v637 = vmul.f32 %v624, %v294
      %v638 = vsel %vm299, %v635, 0.0
      %v639 = vsel %vm299, %v636, 0.0
      %v640 = vadd.f32 %v638, %v639
      %v641 = vsel %vm633, %v637, 0.0
      %v642 = vadd.f32 %v640, %v641
      %643 = vadd.xlane.f32.xlu0 %v642
      %v644 = vpop.xlane.xlu0 %643
      %vm645 = vcmask 3072
      %646 = vst.msk [vmem:[%s262] sm:$0xf] %vm645, %v644
      %v647 = vmul.f32 %v635, %v598
      %v648 = vmul.f32 %v636, %v611
      %v649 = vmul.f32 %v637, %v624
      %v650 = vsel %vm299, %v647, 0.0
      %v651 = vsel %vm299, %v648, 0.0
      %v652 = vadd.f32 %v650, %v651
      %v653 = vsel %vm633, %v649, 0.0
      %v654 = vadd.f32 %v652, %v653
      %655 = vadd.xlane.f32.xlu0 %v654
      %v656 = vpop.xlane.xlu0 %655
      %vm657 = vcmask 11272
      %658 = vst.msk [vmem:[%s262] sm:$0xf] %vm657, %v656
      %p659 = scmp.lt.s32.totalorder %s18, 1
      %s660 = scalar_select %p659, %s18, 1
      %s661 = smul.addr %s660, 3
      %s662 = smul.addr %s661, 4
      %s663 = scalar_lea.vmem %s5, %s662
      %p664 = scmp.lt.s32.totalorder %s18, 1
      %s665 = scalar_select %p664, %s18, 1
      %s666 = smul.addr %s665, 4
      %s667 = scalar_lea.vmem %s6, %s666
      // Predicated region
      $region41: #{resblock_forward.3} parent=39 // pred_check
        %p668 = pneg %p146
      $region42: #{resblock_forward.3} parent=39 // pred_check_branch
        %670 = sbr.rel (%p668) target = $region44
      $region43: #{resblock_forward.3} parent=39 // pred_region
        _
      $region44: #{resblock_forward.3} parent=39 // pred_fallthru
        _
      // Predicated region
      $region45: #{resblock_forward.3} parent=39 // pred_check
        %p671 = pneg %p172
      $region46: #{resblock_forward.3} parent=39 // pred_check_branch
        %673 = sbr.rel (%p671) target = $region48
      $region47: #{resblock_forward.3} parent=39 // pred_region
        _
      $region48: #{resblock_forward.3} parent=39 // pred_fallthru
        _
    $region40: #{resblock_forward.3} parent=5 // pred_fallthru
      _
    %p674 = scmp.le.s32.totalorder 2, %s13
    // Predicated region
    $region49: #{resblock_forward.3} parent=5 // pred_check
      %p675 = pneg %p674
    $region50: #{resblock_forward.3} parent=5 // pred_check_branch
      %677 = sbr.rel (%p675) target = $region52
    $region51: #{resblock_forward.3} parent=5 // pred_region
      %s678 = ssub.s32 %s13, 2
      // Predicated region
      $region53: #{resblock_forward.3} parent=51 // pred_check
        %p679 = pneg %p152
      $region54: #{resblock_forward.3} parent=51 // pred_check_branch
        %681 = sbr.rel (%p679) target = $region56
      $region55: #{resblock_forward.3} parent=51 // pred_region
        %p682 = scmp.lt.s32.totalorder %s19, 1
        %s683 = scalar_select %p682, %s19, 1
        %s684 = smul.addr %s683, 3
        %s685 = smul.addr %s684, 4
        %s686 = scalar_lea.vmem %s5, %s685
      $region56: #{resblock_forward.3} parent=51 // pred_fallthru
        _
      // Predicated region
      $region57: #{resblock_forward.3} parent=51 // pred_check
        %p687 = pneg %p178
      $region58: #{resblock_forward.3} parent=51 // pred_check_branch
        %689 = sbr.rel (%p687) target = $region60
      $region59: #{resblock_forward.3} parent=51 // pred_region
        %p690 = scmp.lt.s32.totalorder %s19, 1
        %s691 = scalar_select %p690, %s19, 1
        %s692 = smul.addr %s691, 4
        %s693 = scalar_lea.vmem %s6, %s692
      $region60: #{resblock_forward.3} parent=51 // pred_fallthru
        _
    $region52: #{resblock_forward.3} parent=5 // pred_fallthru
      _
  $region6: #{resblock_forward.3} parent=0 // loop_footer
    %s17 = sadd.s32 1, %s13
  $region7: #{resblock_forward.3} parent=0 // loop_footer_branch
    %12 = sbr.rel target = $region3
  $region8: #{resblock_forward.3} parent=0 // loop_exit
    _

// kernel: resblock_forward.4
$region0: #{resblock_forward.4}
  #allocation0 [shape = 'u32[]', space=smem, size = 0x4, offset = 0x4, fixed_abs, tag = 'smem constant byte address 0x4 - core index']
  #allocation1 [shape = 'u32[72,128]{1,0:T(1,128)}', space=vmem, size = 0x9000, scoped, tag = 'internal scratch']
  #allocation2 [shape = 'bf16[4,362]{1,0:T(4,128)(2,1)}', space=vmem, size = 0xc00, scoped, tag = 'scratch operand']
  #allocation3 [shape = 'bf16[36,324]{1,0:T(8,128)(2,1)}', space=vmem, size = 0x7800, scoped, tag = 'scratch operand']
  %s0 = inlined_call_operand.vmem [shape: f32[2,4,324], index: 0, kind: input, shape index: {}]
  %s1 = inlined_call_operand.vmem [shape: f32[4,1], index: 1, kind: input, shape index: {}]
  %s2 = inlined_call_operand.vmem [shape: f32[4,1], index: 2, kind: input, shape index: {}]
  %s3 = inlined_call_operand.vmem [shape: bf16[4,36], index: 3, kind: input, shape index: {}]
  %s4 = inlined_call_operand.vmem [shape: f32[1,324], index: 4, kind: input, shape index: {}]
  %s5 = inlined_call_operand.vmem [shape: f32[2,4,324], index: 5, kind: output, shape index: {0}]
  %s6 = inlined_call_operand.vmem [shape: f32[2,4,2], index: 6, kind: output, shape index: {1}]
  %7 = xla_tuple %s5, %s6
  %s8 = sld [smem:[#allocation0]]
  $region61: #{resblock_forward.4} parent=0
    _
  %s10 = ssub.s32 1, %s8
  %s11 = scalar_select 0, %s10, %s8
  loop: start=0, step=1, limit=4
  $region2: #{resblock_forward.4} parent=0 // loop_pre_header
    _
  $region3: #{resblock_forward.4} parent=0 // loop_header
    %s13 = sphi 0, %s17
    %p14 = scmp.ge.s32.totalorder %s13, 4
    %s23 = sphi 0, %s25
    %s26 = sphi 0, %s23
    %s27 = sphi 0, %s26
    %s43 = sphi 0, %s27
    %s47 = sphi 0, %s47
    %s49 = sphi 0, %s47
    %s50 = sphi 0, %s49
    %s64 = sphi 0, %s50
    %s68 = sphi 0, %s68
    %s70 = sphi 0, %s68
    %s71 = sphi 0, %s70
    %s85 = sphi 0, %s71
    %s89 = sphi 0, %s89
    %s91 = sphi 0, %s89
    %s92 = sphi 0, %s91
    %s106 = sphi 0, %s92
    %s110 = sphi 0, %s110
    %s112 = sphi 0, %s110
    %s113 = sphi 0, %s112
    %s127 = sphi 0, %s113
    %s133 = sphi 0, %s135
    %s136 = sphi 0, %s133
    %s137 = sphi 0, %s136
    %s153 = sphi 0, %s137
    %s159 = sphi 0, %s161
    %s162 = sphi 0, %s159
    %s163 = sphi 0, %s162
    %s179 = sphi 0, %s163
  $region4: #{resblock_forward.4} parent=0 // loop_header_branch
    %16 = sbr.rel (%p14) target = $region8
  $region5: #{resblock_forward.4} parent=0 // loop_body
    %s18 = ssub.s32 %s13, 1
    %s19 = ssub.s32 %s13, 2
    %s20 = sadd.s32 %s13, 1
    %s21 = ssub.s32 %s13, %s20
    %p22 = scmp.eq.s32.totalorder %s21, 0
    %s24 = sadd.s32 %s23, 1
    %s25 = scalar_select %p22, %s23, %s24
    %p28 = pneg %p22
    %p29 = scmp.eq.s32.totalorder %s13, 1
    %p30 = por %p28, %p29
    %p31 = scmp.ne.s32.totalorder %s23, %s26
    %p32 = scmp.eq.s32.totalorder %s13, 0
    %p33 = por %p31, %p32
    %p34 = scmp.ne.s32.totalorder %s23, %s26
    %p35 = scmp.eq.s32.totalorder %s18, 1
    %p36 = por %p34, %p35
    %p37 = scmp.ne.s32.totalorder %s26, %s27
    %p38 = scmp.eq.s32.totalorder %s18, 0
    %p39 = por %p37, %p38
    %p40 = scmp.ne.s32.totalorder %s26, %s27
    %p41 = scmp.eq.s32.totalorder %s19, 1
    %p42 = por %p40, %p41
    %p44 = scmp.ne.s32.totalorder %s27, %s43
    %p45 = scmp.eq.s32.totalorder %s19, 0
    %p46 = por %p44, %p45
    %s48 = sadd.s32 %s47, 1
    %p51 = scmp.eq.s32.totalorder %s13, 1
    %p52 = scmp.ne.s32.totalorder %s47, %s49
    %p53 = scmp.eq.s32.totalorder %s13, 0
    %p54 = por %p52, %p53
    %p55 = scmp.ne.s32.totalorder %s47, %s49
    %p56 = scmp.eq.s32.totalorder %s18, 1
    %p57 = por %p55, %p56
    %p58 = scmp.ne.s32.totalorder %s49, %s50
    %p59 = scmp.eq.s32.totalorder %s18, 0
    %p60 = por %p58, %p59
    %p61 = scmp.ne.s32.totalorder %s49, %s50
    %p62 = scmp.eq.s32.totalorder %s19, 1
    %p63 = por %p61, %p62
    %p65 = scmp.ne.s32.totalorder %s50, %s64
    %p66 = scmp.eq.s32.totalorder %s19, 0
    %p67 = por %p65, %p66
    %s69 = sadd.s32 %s68, 1
    %p72 = scmp.eq.s32.totalorder %s13, 1
    %p73 = scmp.ne.s32.totalorder %s68, %s70
    %p74 = scmp.eq.s32.totalorder %s13, 0
    %p75 = por %p73, %p74
    %p76 = scmp.ne.s32.totalorder %s68, %s70
    %p77 = scmp.eq.s32.totalorder %s18, 1
    %p78 = por %p76, %p77
    %p79 = scmp.ne.s32.totalorder %s70, %s71
    %p80 = scmp.eq.s32.totalorder %s18, 0
    %p81 = por %p79, %p80
    %p82 = scmp.ne.s32.totalorder %s70, %s71
    %p83 = scmp.eq.s32.totalorder %s19, 1
    %p84 = por %p82, %p83
    %p86 = scmp.ne.s32.totalorder %s71, %s85
    %p87 = scmp.eq.s32.totalorder %s19, 0
    %p88 = por %p86, %p87
    %s90 = sadd.s32 %s89, 1
    %p93 = scmp.eq.s32.totalorder %s13, 1
    %p94 = scmp.ne.s32.totalorder %s89, %s91
    %p95 = scmp.eq.s32.totalorder %s13, 0
    %p96 = por %p94, %p95
    %p97 = scmp.ne.s32.totalorder %s89, %s91
    %p98 = scmp.eq.s32.totalorder %s18, 1
    %p99 = por %p97, %p98
    %p100 = scmp.ne.s32.totalorder %s91, %s92
    %p101 = scmp.eq.s32.totalorder %s18, 0
    %p102 = por %p100, %p101
    %p103 = scmp.ne.s32.totalorder %s91, %s92
    %p104 = scmp.eq.s32.totalorder %s19, 1
    %p105 = por %p103, %p104
    %p107 = scmp.ne.s32.totalorder %s92, %s106
    %p108 = scmp.eq.s32.totalorder %s19, 0
    %p109 = por %p107, %p108
    %s111 = sadd.s32 %s110, 1
    %p114 = scmp.eq.s32.totalorder %s13, 1
    %p115 = scmp.ne.s32.totalorder %s110, %s112
    %p116 = scmp.eq.s32.totalorder %s13, 0
    %p117 = por %p115, %p116
    %p118 = scmp.ne.s32.totalorder %s110, %s112
    %p119 = scmp.eq.s32.totalorder %s18, 1
    %p120 = por %p118, %p119
    %p121 = scmp.ne.s32.totalorder %s112, %s113
    %p122 = scmp.eq.s32.totalorder %s18, 0
    %p123 = por %p121, %p122
    %p124 = scmp.ne.s32.totalorder %s112, %s113
    %p125 = scmp.eq.s32.totalorder %s19, 1
    %p126 = por %p124, %p125
    %p128 = scmp.ne.s32.totalorder %s113, %s127
    %p129 = scmp.eq.s32.totalorder %s19, 0
    %p130 = por %p128, %p129
    %s131 = ssub.s32 %s13, %s20
    %p132 = scmp.eq.s32.totalorder %s131, 0
    %s134 = sadd.s32 %s133, 1
    %s135 = scalar_select %p132, %s133, %s134
    %p138 = pneg %p132
    %p139 = scmp.eq.s32.totalorder %s13, 1
    %p140 = por %p138, %p139
    %p141 = scmp.ne.s32.totalorder %s133, %s136
    %p142 = scmp.eq.s32.totalorder %s13, 0
    %p143 = por %p141, %p142
    %p144 = scmp.ne.s32.totalorder %s133, %s136
    %p145 = scmp.eq.s32.totalorder %s18, 1
    %p146 = por %p144, %p145
    %p147 = scmp.ne.s32.totalorder %s136, %s137
    %p148 = scmp.eq.s32.totalorder %s18, 0
    %p149 = por %p147, %p148
    %p150 = scmp.ne.s32.totalorder %s136, %s137
    %p151 = scmp.eq.s32.totalorder %s19, 1
    %p152 = por %p150, %p151
    %p154 = scmp.ne.s32.totalorder %s137, %s153
    %p155 = scmp.eq.s32.totalorder %s19, 0
    %p156 = por %p154, %p155
    %s157 = ssub.s32 %s13, %s20
    %p158 = scmp.eq.s32.totalorder %s157, 0
    %s160 = sadd.s32 %s159, 1
    %s161 = scalar_select %p158, %s159, %s160
    %p164 = pneg %p158
    %p165 = scmp.eq.s32.totalorder %s13, 1
    %p166 = por %p164, %p165
    %p167 = scmp.ne.s32.totalorder %s159, %s162
    %p168 = scmp.eq.s32.totalorder %s13, 0
    %p169 = por %p167, %p168
    %p170 = scmp.ne.s32.totalorder %s159, %s162
    %p171 = scmp.eq.s32.totalorder %s18, 1
    %p172 = por %p170, %p171
    %p173 = scmp.ne.s32.totalorder %s162, %s163
    %p174 = scmp.eq.s32.totalorder %s18, 0
    %p175 = por %p173, %p174
    %p176 = scmp.ne.s32.totalorder %s162, %s163
    %p177 = scmp.eq.s32.totalorder %s19, 1
    %p178 = por %p176, %p177
    %p180 = scmp.ne.s32.totalorder %s163, %s179
    %p181 = scmp.eq.s32.totalorder %s19, 0
    %p182 = por %p180, %p181
    %p183 = scmp.le.s32.totalorder 1, %s13
    %p184 = scmp.lt.s32.totalorder %s13, 3
    %p185 = pnand %p183, %p184
    %p186 = pneg %p185
    // Predicated region
    $region9: #{resblock_forward.4} parent=5 // pred_check
      _
    $region10: #{resblock_forward.4} parent=5 // pred_check_branch
      %188 = sbr.rel (%p185) target = $region12
    $region11: #{resblock_forward.4} parent=5 // pred_region
      %s189 = ssub.s32 %s13, 1
      // Predicated region
      $region13: #{resblock_forward.4} parent=11 // pred_check
        %p190 = pneg %p60
      $region14: #{resblock_forward.4} parent=11 // pred_check_branch
        %192 = sbr.rel (%p190) target = $region16
      $region15: #{resblock_forward.4} parent=11 // pred_region
        _
      $region16: #{resblock_forward.4} parent=11 // pred_fallthru
        _
      // Predicated region
      $region17: #{resblock_forward.4} parent=11 // pred_check
        %p193 = pneg %p81
      $region18: #{resblock_forward.4} parent=11 // pred_check_branch
        %195 = sbr.rel (%p193) target = $region20
      $region19: #{resblock_forward.4} parent=11 // pred_region
        _
      $region20: #{resblock_forward.4} parent=11 // pred_fallthru
        _
      // Predicated region
      $region21: #{resblock_forward.4} parent=11 // pred_check
        %p196 = pneg %p102
      $region22: #{resblock_forward.4} parent=11 // pred_check_branch
        %198 = sbr.rel (%p196) target = $region24
      $region23: #{resblock_forward.4} parent=11 // pred_region
        _
      $region24: #{resblock_forward.4} parent=11 // pred_fallthru
        _
      // Predicated region
      $region25: #{resblock_forward.4} parent=11 // pred_check
        %p199 = pneg %p123
      $region26: #{resblock_forward.4} parent=11 // pred_check_branch
        %201 = sbr.rel (%p199) target = $region28
      $region27: #{resblock_forward.4} parent=11 // pred_region
        _
      $region28: #{resblock_forward.4} parent=11 // pred_fallthru
        _
    $region12: #{resblock_forward.4} parent=5 // pred_fallthru
      _
    %p202 = scmp.lt.s32.totalorder %s13, 2
    // Predicated region
    $region29: #{resblock_forward.4} parent=5 // pred_check
      %p203 = pneg %p202
    $region30: #{resblock_forward.4} parent=5 // pred_check_branch
      %205 = sbr.rel (%p203) target = $region32
    $region31: #{resblock_forward.4} parent=5 // pred_region
      // Predicated region
      $region33: #{resblock_forward.4} parent=31 // pred_check
        %p206 = pneg %p33
      $region34: #{resblock_forward.4} parent=31 // pred_check_branch
        %208 = sbr.rel (%p206) target = $region36
      $region35: #{resblock_forward.4} parent=31 // pred_region
        %p209 = scmp.lt.s32.totalorder %s13, 1
        %s210 = scalar_select %p209, %s13, 1
        %s211 = smul.addr %s210, 3
        %s212 = smul.addr %s211, 4
        %s213 = scalar_lea.vmem %s0, %s212
      $region36: #{resblock_forward.4} parent=31 // pred_fallthru
        _
    $region32: #{resblock_forward.4} parent=5 // pred_fallthru
      _
    %p214 = scmp.le.s32.totalorder 1, %s13
    %p215 = scmp.lt.s32.totalorder %s13, 3
    %p216 = pnand %p214, %p215
    %p217 = pneg %p216
    // Predicated region
    $region37: #{resblock_forward.4} parent=5 // pred_check
      _
    $region38: #{resblock_forward.4} parent=5 // pred_check_branch
      %219 = sbr.rel (%p216) target = $region40
    $region39: #{resblock_forward.4} parent=5 // pred_region
      %s220 = ssub.s32 %s13, 1
      %p221 = scmp.lt.s32.totalorder %s18, 1
      %s222 = scalar_select %p221, %s18, 1
      %s223 = smul.addr %s222, 3
      %s224 = smul.addr %s223, 4
      %s225 = scalar_lea.vmem %s0, %s224
      %p226 = pneg %p39
      %p227 = pneg %p36
      %p228 = pneg %p60
      %p229 = pneg %p57
      %p230 = pneg %p81
      %p231 = pneg %p78
      %p232 = pneg %p102
      %p233 = pneg %p99
      %p234 = pneg %p123
      %p235 = pneg %p120
      %p236 = pneg %p149
      %p237 = pneg %p146
      %p238 = scmp.lt.s32.totalorder %s18, 1
      %s239 = scalar_select %p238, %s18, 1
      %s240 = smul.addr %s239, 3
      %s241 = smul.addr %s240, 4
      %s242 = scalar_lea.vmem %s5, %s241
      %p243 = pneg %p175
      %p244 = pneg %p172
      %p245 = scmp.lt.s32.totalorder %s18, 1
      %s246 = scalar_select %p245, %s18, 1
      %s247 = smul.addr %s246, 4
      %s248 = scalar_lea.vmem %s6, %s247
      %p249 = scmp.lt.s32.totalorder %s18, 1
      %s250 = scalar_select %p249, %s18, 1
      %s251 = smul.addr %s250, 3
      %s252 = smul.addr %s251, 4
      %s253 = scalar_lea.vmem %s0, %s252
      %p254 = scmp.lt.s32.totalorder %s18, 1
      %s255 = scalar_select %p254, %s18, 1
      %s256 = smul.addr %s255, 3
      %s257 = smul.addr %s256, 4
      %s258 = scalar_lea.vmem %s5, %s257
      %p259 = scmp.lt.s32.totalorder %s18, 1
      %s260 = scalar_select %p259, %s18, 1
      %s261 = smul.addr %s260, 4
      %s262 = scalar_lea.vmem %s6, %s261
      %v264 = vld [vmem:[%s4] sm:$0x7]
      %v265 = vld [vmem:[%s253] sm:$0xff]
      %v266 = vld [vmem:[%s253 + $0x8] sm:$0xf]
      %v267 = vld [vmem:[%s1] sm:$0xf]
      %269 = vset.pattern.permute.xlu0 0
      %270 = vperm.xlu0 %269, %v267
      %v271 = vpop.permute.xlu0 %270
      %v273 = vunpack.c.l.s4 839922192
      %v274 = vunpack.c.0.s8 %v273
      %v275 = vperm.slane %v271, %v274
      %v277 = vmul.f32 %v265, %v275
      %v278 = vmul.f32 %v266, %v275
      %v279 = vld [vmem:[%s2] sm:$0xf]
      %281 = vset.pattern.permute.xlu0 0
      %282 = vperm.xlu0 %281, %v279
      %v283 = vpop.permute.xlu0 %282
      %v285 = vunpack.c.l.s4 839922192
      %v286 = vunpack.c.0.s8 %v285
      %v287 = vperm.slane %v283, %v286
      %v289 = vadd.f32 %v277, %v287
      %v290 = vadd.f32 %v278, %v287
      %v291 = vmax.f32 %v289, 0.0
      %v292 = vmax.f32 %v290, 0.0
      %v294 = vperm.slane %v264, 0
      %v295 = vperm.slane %v264, 1
      %v296 = vperm.slane %v264, 2
      %v300 = vrot.slane %v295, 4
      %vm301 = vcmask 1043456
      %v302 = vsel %vm301, %v294, %v300
      %v304 = vmul.f32 %v291, %v302
      %v305 = vmul.f32 %v292, %v296
      %vm306 = vcmask 1041408
      %vm307 = vcmask 1043458
      %vm308 = vmor %vm307, %vm306
      %vm309 = vcmask 865284
      %vm310 = vmor %vm309, %vm308
      %311 = vst.msk [vmem:[#allocation2] sm:$0x3f] %vm310, 0
      %314 = vst [vmem:[#allocation1] ss:$2 sm:$0xff] %v304
      %s315 = scalar_lea.vmem [#allocation1], 16
      %316 = vst [vmem:[%s315] ss:$2 sm:$0xff] %v305
      %v317 = vld.sshfl [vmem:[#allocation1] sm:$0xff pattern:$0x75316420]
      %v318 = vld.sshfl [vmem:[#allocation1 + $0x8] sm:$0xff pattern:$0x75316420]
      %v319 = vld.sshfl [vmem:[#allocation1 + $0x10] sm:$0xff pattern:$0x75316420]
      %v323 = vpack.c.bf16 %v318, %v317
      %v324 = vpack.c.bf16 %v319, %v319
      %v327 = vrot.slane %v323, 2
      %v328 = vrot.slane %v324, 4
      %v329 = vrot.slane %v324, 6
      %v332 = vsel %vm306, %v323, %v327
      %vm333 = vcmask 1045508
      %v336 = vsel %vm333, %v328, %v329
      %v337 = vsel %vm301, %v332, %v336
      %339 = vrot.lane.b32.xlu0 %v337, 19
      %v340 = vpop.permute.xlu0 %339
      %v341 = vrot.slane %v340, 6
      %vm342 = vcmask 154624
      %v343 = vsel %vm342, %v341, %v340
      %vm345 = vcmask 1041560
      %vm346 = vmor %vm307, %vm345
      %vm347 = vcmask 709636
      %vm348 = vmor %vm347, %vm346
      %349 = vst.msk [vmem:[#allocation2] sm:$0x3f] %vm348, %v343
      %v350 = vld [vmem:[#allocation2] sm:$0x3f]
      %352 = vst [vmem:[#allocation1] ss:$2 sm:$0xff] %v350
      %v353 = vld.sshfl [vmem:[#allocation1] sm:$0xff pattern:$0x75643120]
      %v354 = vld.sshfl [vmem:[#allocation1 + $0x8] sm:$0xff pattern:$0x75643120]
      %357 = vst [vmem:[#allocation3] sm:$0x33] %v353
      %vm358 = vcmask 549888
      %359 = vst.msk [vmem:[#allocation3 + $0x8] sm:$0x3] %vm358, %v354
      %v360 = vld [vmem:[#allocation2] sm:$0x3f]
      %s362 = scalar_lea.vmem [#allocation1], 1
      %363 = vst [vmem:[%s362] ss:$2 sm:$0xff] %v360
      %v364 = vld.sshfl [vmem:[#allocation1] sm:$0xff pattern:$0x75643120]
      %v366 = vld.sshfl [vmem:[#allocation1 + $0x8] sm:$0xff pattern:$0x75643120]
      %368 = vrot.lane.b32.xlu0 %v364, 127
      %v369 = vpop.permute.xlu0 %368
      %370 = vrot.lane.b32.xlu0 %v366, 127
      %v371 = vpop.permute.xlu0 %370
      %v372 = vrot.slane %v369, 4
      %v373 = vrot.slane %v371, 4
      %vm374 = vcmask 1043456
      %v375 = vsel %vm374, %v372, %v373
      %vm376 = vcmask 1039360
      %v377 = vsel %vm376, %v369, %v375
      %380 = vst [vmem:[#allocation3] sm:$0xcc] %v377
      %vm381 = vcmask 551938
      %382 = vst.msk [vmem:[#allocation3 + $0x8] sm:$0xc] %vm381, %v371
      %v383 = vld [vmem:[#allocation2] sm:$0x3f]
      %385 = vst [vmem:[#allocation1] ss:$2 sm:$0xff] %v383
      %v386 = vld.sshfl [vmem:[#allocation1] sm:$0xff pattern:$0x75643120]
      %v388 = vld.sshfl [vmem:[#allocation1 + $0x8] sm:$0xff pattern:$0x75643120]
      %390 = vrot.lane.b32.xlu0 %v386, 126
      %v391 = vpop.permute.xlu0 %390
      %392 = vrot.lane.b32.xlu0 %v388, 126
      %v393 = vpop.permute.xlu0 %392
      %v394 = vrot.slane %v391, 4
      %v395 = vrot.slane %v393, 4
      %v396 = vsel %vm374, %v394, %v395
      %vm397 = vcmask 1031168
      %v398 = vsel %vm397, %v391, %v396
      %401 = vst [vmem:[#allocation3 + $0xc] sm:$0x33] %v398
      %402 = vst.msk [vmem:[#allocation3 + $0x14] sm:$0x3] %vm358, %v393
      %v403 = vld [vmem:[#allocation2] sm:$0x3f]
      %s405 = scalar_lea.vmem [#allocation1], 1
      %406 = vst [vmem:[%s405] ss:$2 sm:$0xff] %v403
      %v407 = vld.sshfl [vmem:[#allocation1] sm:$0xff pattern:$0x75643120]
      %v409 = vld.sshfl [vmem:[#allocation1 + $0x8] sm:$0xff pattern:$0x75643120]
      %411 = vrot.lane.b32.xlu0 %v407, 110
      %v412 = vpop.permute.xlu0 %411
      %413 = vrot.lane.b32.xlu0 %v409, 110
      %v414 = vpop.permute.xlu0 %413
      %v415 = vrot.slane %v412, 4
      %v416 = vrot.slane %v414, 4
      %v417 = vsel %vm374, %v415, %v416
      %vm418 = vcmask 900096
      %v419 = vsel %vm418, %v412, %v417
      %422 = vst [vmem:[#allocation3 + $0xc] sm:$0xcc] %v419
      %423 = vst.msk [vmem:[#allocation3 + $0x14] sm:$0xc] %vm381, %v414
      %v424 = vld [vmem:[#allocation2] sm:$0x3f]
      %426 = vst [vmem:[#allocation1] ss:$2 sm:$0xff] %v424
      %v427 = vld.sshfl [vmem:[#allocation1] sm:$0xff pattern:$0x75643120]
      %v429 = vld.sshfl [vmem:[#allocation1 + $0x8] sm:$0xff pattern:$0x75643120]
      %431 = vrot.lane.b32.xlu0 %v427, 109
      %v432 = vpop.permute.xlu0 %431
      %433 = vrot.lane.b32.xlu0 %v429, 109
      %v434 = vpop.permute.xlu0 %433
      %v435 = vrot.slane %v432, 4
      %v436 = vrot.slane %v434, 4
      %v437 = vsel %vm374, %v435, %v436
      %vm438 = vcmask 891904
      %v439 = vsel %vm438, %v432, %v437
      %442 = vst [vmem:[#allocation3 + $0x18] sm:$0x33] %v439
      %443 = vst.msk [vmem:[#allocation3 + $0x20] sm:$0x3] %vm358, %v434
      %v444 = vld [vmem:[#allocation2] sm:$0x3f]
      %s446 = scalar_lea.vmem [#allocation1], 1
      %447 = vst [vmem:[%s446] ss:$2 sm:$0xff] %v444
      %v448 = vld.sshfl [vmem:[#allocation1] sm:$0xff pattern:$0x75643120]
      %v450 = vld.sshfl [vmem:[#allocation1 + $0x8] sm:$0xff pattern:$0x75643120]
      %452 = vrot.lane.b32.xlu0 %v448, 108
      %v453 = vpop.permute.xlu0 %452
      %454 = vrot.lane.b32.xlu0 %v450, 108
      %v455 = vpop.permute.xlu0 %454
      %v456 = vrot.slane %v453, 4
      %v457 = vrot.slane %v455, 4
      %v458 = vsel %vm374, %v456, %v457
      %vm459 = vcmask 883712
      %v460 = vsel %vm459, %v453, %v458
      %463 = vst [vmem:[#allocation3 + $0x18] sm:$0xcc] %v460
      %464 = vst.msk [vmem:[#allocation3 + $0x20] sm:$0xc] %vm381, %v455
      %v465 = vld [vmem:[#allocation2] sm:$0x3f]
      %467 = vst [vmem:[#allocation1] ss:$2 sm:$0xff] %v465
      %v468 = vld.sshfl [vmem:[#allocation1] sm:$0xff pattern:$0x75643120]
      %v470 = vld.sshfl [vmem:[#allocation1 + $0x8] sm:$0xff pattern:$0x75643120]
      %472 = vrot.lane.b32.xlu0 %v468, 92
      %v473 = vpop.permute.xlu0 %472
      %474 = vrot.lane.b32.xlu0 %v470, 92
      %v475 = vpop.permute.xlu0 %474
      %v476 = vrot.slane %v473, 4
      %v477 = vrot.slane %v475, 4
      %v478 = vsel %vm374, %v476, %v477
      %vm479 = vcmask 752640
      %v480 = vsel %vm479, %v473, %v478
      %483 = vst [vmem:[#allocation3 + $0x24] sm:$0x33] %v480
      %484 = vst.msk [vmem:[#allocation3 + $0x2c] sm:$0x3] %vm358, %v475
      %v485 = vld [vmem:[#allocation2] sm:$0x3f]
      %s487 = scalar_lea.vmem [#allocation1], 1
      %488 = vst [vmem:[%s487] ss:$2 sm:$0xff] %v485
      %v489 = vld.sshfl [vmem:[#allocation1] sm:$0xff pattern:$0x75643120]
      %v491 = vld.sshfl [vmem:[#allocation1 + $0x8] sm:$0xff pattern:$0x75643120]
      %493 = vrot.lane.b32.xlu0 %v489, 91
      %v494 = vpop.permute.xlu0 %493
      %495 = vrot.lane.b32.xlu0 %v491, 91
      %v496 = vpop.permute.xlu0 %495
      %v497 = vrot.slane %v494, 4
      %v498 = vrot.slane %v496, 4
      %v499 = vsel %vm374, %v497, %v498
      %vm500 = vcmask 744448
      %v501 = vsel %vm500, %v494, %v499
      %504 = vst [vmem:[#allocation3 + $0x24] sm:$0xcc] %v501
      %505 = vst.msk [vmem:[#allocation3 + $0x2c] sm:$0xc] %vm381, %v496
      %v506 = vld [vmem:[#allocation2] sm:$0x3f]
      %508 = vst [vmem:[#allocation1] ss:$2 sm:$0xff] %v506
      %v509 = vld.sshfl [vmem:[#allocation1] sm:$0xff pattern:$0x75643120]
      %v511 = vld.sshfl [vmem:[#allocation1 + $0x8] sm:$0xff pattern:$0x75643120]
      %513 = vrot.lane.b32.xlu0 %v509, 90
      %v514 = vpop.permute.xlu0 %513
      %515 = vrot.lane.b32.xlu0 %v511, 90
      %v516 = vpop.permute.xlu0 %515
      %v517 = vrot.slane %v514, 4
      %v518 = vrot.slane %v516, 4
      %v519 = vsel %vm374, %v517, %v518
      %vm520 = vcmask 736256
      %v521 = vsel %vm520, %v514, %v519
      %524 = vst [vmem:[#allocation3 + $0x30] sm:$0x33] %v521
      %525 = vst.msk [vmem:[#allocation3 + $0x38] sm:$0x3] %vm358, %v516
      %v526 = vld [vmem:[%s3] sm:$0x3]
      %v527 = vld [vmem:[#allocation3] sm:$0xff]
      %v528 = vld [vmem:[#allocation3 + $0x8] sm:$0xf]
      %v529 = vld [vmem:[#allocation3 + $0xc] sm:$0xff]
      %v530 = vld [vmem:[#allocation3 + $0x14] sm:$0xf]
      %v531 = vld [vmem:[#allocation3 + $0x18] sm:$0xff]
      %v532 = vld [vmem:[#allocation3 + $0x20] sm:$0xf]
      %v533 = vld [vmem:[#allocation3 + $0x24] sm:$0xff]
      %v534 = vld [vmem:[#allocation3 + $0x2c] sm:$0xf]
      %v535 = vld [vmem:[#allocation3 + $0x30] sm:$0x33]
      %v536 = vld [vmem:[#allocation3 + $0x38] sm:$0x3]
      %v547 = vunpack.c.l.b16 %v527
      %v548 = vunpack.c.h.b16 %v527
      %v549 = vunpack.c.l.b16 %v528
      %v550 = vunpack.c.l.b16 %v529
      %v551 = vunpack.c.h.b16 %v529
      %v552 = vunpack.c.l.b16 %v530
      %v553 = vunpack.c.l.b16 %v531
      %v554 = vunpack.c.h.b16 %v531
      %v555 = vunpack.c.l.b16 %v532
      %v556 = vunpack.c.l.b16 %v533
      %v557 = vunpack.c.h.b16 %v533
      %v558 = vunpack.c.l.b16 %v534
      %v559 = vunpack.c.l.b16 %v535
      %v560 = vunpack.c.h.b16 %v535
      %v561 = vunpack.c.l.b16 %v536
      %v562 = vpack.c.b16 %v550, %v547
      %v563 = vpack.c.b16 %v551, %v548
      %v564 = vpack.c.b16 %v552, %v549
      %v565 = vpack.c.b16 %v556, %v553
      %v566 = vpack.c.b16 %v557, %v554
      %v567 = vpack.c.b16 %v558, %v555
      %v568 = vpack.c.b16 %v559, %v559
      %v569 = vpack.c.b16 %v560, %v560
      %v570 = vpack.c.b16 %v561, %v561
      %vm577 = vcmask 293888
      %v579 = vsel %vm577, %v526, 0
      %v582 = vsel %vm306, %v568, 0
      %v585 = vsel %vm306, %v569, 0
      %v588 = vsel %vm306, %v570, 0
      %590 = vmatpush.bf16.msra.mxu0 0
      %591 = vmatpush.bf16.msra.mxu0 0
      %592 = vmatpush.bf16.msra.mxu0 0
      %593 = vmatpush.bf16.msra.mxu0 0
      %594 = vmatpush.bf16.msra.mxu0 0
      %595 = vmatpush.bf16.msra.mxu0 %v582
      %596 = vmatpush.bf16.msra.mxu0 %v565
      %597 = vmatpush.bf16.msra.mxu0 %v562
      %598 = vmatmul.bf16.gmra.mxu0 %v579
      %v599 = vpop.f32.mrf.mxu0
      %v600 = vadd.f32 0.0, %v599
      %v601 = vpop.f32.mrf.mxu0
      %602 = vdwg.mxu0
      %603 = vmatpush.bf16.msra.mxu0 0
      %604 = vmatpush.bf16.msra.mxu0 0
      %605 = vmatpush.bf16.msra.mxu0 0
      %606 = vmatpush.bf16.msra.mxu0 0
      %607 = vmatpush.bf16.msra.mxu0 0
      %608 = vmatpush.bf16.msra.mxu0 %v585
      %609 = vmatpush.bf16.msra.mxu0 %v566
      %610 = vmatpush.bf16.msra.mxu0 %v563
      %611 = vmatmul.bf16.gmra.mxu0 %v579
      %v612 = vpop.f32.mrf.mxu0
      %v613 = vadd.f32 0.0, %v612
      %v614 = vpop.f32.mrf.mxu0
      %615 = vdwg.mxu0
      %616 = vmatpush.bf16.msra.mxu0 0
      %617 = vmatpush.bf16.msra.mxu0 0
      %618 = vmatpush.bf16.msra.mxu0 0
      %619 = vmatpush.bf16.msra.mxu0 0
      %620 = vmatpush.bf16.msra.mxu0 0
      %621 = vmatpush.bf16.msra.mxu0 %v588
      %622 = vmatpush.bf16.msra.mxu0 %v567
      %623 = vmatpush.bf16.msra.mxu0 %v564
      %624 = vmatmul.bf16.gmra.mxu0 %v579
      %v625 = vpop.f32.mrf.mxu0
      %v626 = vadd.f32 0.0, %v625
      %v627 = vpop.f32.mrf.mxu0
      %628 = vdwg.mxu0
      %v631 = vrot.slane %v613, 4
      %v632 = vsel %vm301, %v600, %v631
      %634 = vst [vmem:[%s258] sm:$0xff] %v632
      %vm635 = vcmask 551936
      %636 = vst.msk [vmem:[%s258 + $0x8] sm:$0xf] %vm635, %v626
      %v637 = vmul.f32 %v600, %v294
      %v638 = vmul.f32 %v613, %v295
      %v639 = vmul.f32 %v626, %v296
      %v640 = vsel %vm301, %v637, 0.0
      %v641 = vsel %vm301, %v638, 0.0
      %v642 = vadd.f32 %v640, %v641
      %v643 = vsel %vm635, %v639, 0.0
      %v644 = vadd.f32 %v642, %v643
      %645 = vadd.xlane.f32.xlu0 %v644
      %v646 = vpop.xlane.xlu0 %645
      %vm647 = vcmask 3072
      %648 = vst.msk [vmem:[%s262] sm:$0xf] %vm647, %v646
      %v649 = vmul.f32 %v637, %v600
      %v650 = vmul.f32 %v638, %v613
      %v651 = vmul.f32 %v639, %v626
      %v652 = vsel %vm301, %v649, 0.0
      %v653 = vsel %vm301, %v650, 0.0
      %v654 = vadd.f32 %v652, %v653
      %v655 = vsel %vm635, %v651, 0.0
      %v656 = vadd.f32 %v654, %v655
      %657 = vadd.xlane.f32.xlu0 %v656
      %v658 = vpop.xlane.xlu0 %657
      %vm659 = vcmask 11272
      %660 = vst.msk [vmem:[%s262] sm:$0xf] %vm659, %v658
      %p661 = scmp.lt.s32.totalorder %s18, 1
      %s662 = scalar_select %p661, %s18, 1
      %s663 = smul.addr %s662, 3
      %s664 = smul.addr %s663, 4
      %s665 = scalar_lea.vmem %s5, %s664
      %p666 = scmp.lt.s32.totalorder %s18, 1
      %s667 = scalar_select %p666, %s18, 1
      %s668 = smul.addr %s667, 4
      %s669 = scalar_lea.vmem %s6, %s668
      // Predicated region
      $region41: #{resblock_forward.4} parent=39 // pred_check
        %p670 = pneg %p146
      $region42: #{resblock_forward.4} parent=39 // pred_check_branch
        %672 = sbr.rel (%p670) target = $region44
      $region43: #{resblock_forward.4} parent=39 // pred_region
        _
      $region44: #{resblock_forward.4} parent=39 // pred_fallthru
        _
      // Predicated region
      $region45: #{resblock_forward.4} parent=39 // pred_check
        %p673 = pneg %p172
      $region46: #{resblock_forward.4} parent=39 // pred_check_branch
        %675 = sbr.rel (%p673) target = $region48
      $region47: #{resblock_forward.4} parent=39 // pred_region
        _
      $region48: #{resblock_forward.4} parent=39 // pred_fallthru
        _
    $region40: #{resblock_forward.4} parent=5 // pred_fallthru
      _
    %p676 = scmp.le.s32.totalorder 2, %s13
    // Predicated region
    $region49: #{resblock_forward.4} parent=5 // pred_check
      %p677 = pneg %p676
    $region50: #{resblock_forward.4} parent=5 // pred_check_branch
      %679 = sbr.rel (%p677) target = $region52
    $region51: #{resblock_forward.4} parent=5 // pred_region
      %s680 = ssub.s32 %s13, 2
      // Predicated region
      $region53: #{resblock_forward.4} parent=51 // pred_check
        %p681 = pneg %p152
      $region54: #{resblock_forward.4} parent=51 // pred_check_branch
        %683 = sbr.rel (%p681) target = $region56
      $region55: #{resblock_forward.4} parent=51 // pred_region
        %p684 = scmp.lt.s32.totalorder %s19, 1
        %s685 = scalar_select %p684, %s19, 1
        %s686 = smul.addr %s685, 3
        %s687 = smul.addr %s686, 4
        %s688 = scalar_lea.vmem %s5, %s687
      $region56: #{resblock_forward.4} parent=51 // pred_fallthru
        _
      // Predicated region
      $region57: #{resblock_forward.4} parent=51 // pred_check
        %p689 = pneg %p178
      $region58: #{resblock_forward.4} parent=51 // pred_check_branch
        %691 = sbr.rel (%p689) target = $region60
      $region59: #{resblock_forward.4} parent=51 // pred_region
        %p692 = scmp.lt.s32.totalorder %s19, 1
        %s693 = scalar_select %p692, %s19, 1
        %s694 = smul.addr %s693, 4
        %s695 = scalar_lea.vmem %s6, %s694
      $region60: #{resblock_forward.4} parent=51 // pred_fallthru
        _
    $region52: #{resblock_forward.4} parent=5 // pred_fallthru
      _
  $region6: #{resblock_forward.4} parent=0 // loop_footer
    %s17 = sadd.s32 1, %s13
  $region7: #{resblock_forward.4} parent=0 // loop_footer_branch
    %12 = sbr.rel target = $region3
  $region8: #{resblock_forward.4} parent=0 // loop_exit
    _

</llo_original>
